<compile_context>
chip_gen: v6e
topology: v6e:2x2x1
jax: 0.10.0
libtpu: 0.0.40
codegen_flags: <defaults>
</compile_context>

<pallas_src>
import jax
import jax.numpy as jnp
from jax import lax
from jax.experimental import pallas as pl
from jax.experimental.pallas import tpu as pltpu

# ---------------------------------------------------------------------------
# Model dimensions (matches the nn.Sequential in the PyTorch module)
# ---------------------------------------------------------------------------
LAYER_DIMS = [128, 256, 512, 128, 32, 1]   # out_features per Linear
DEFAULT_BATCH_TILE = 1024                  # rows per grid step (multiple of 128)
LANE = 128


def _round_up(x, m):
    return (x + m - 1) // m * m


# Packed "misc" buffer layout: all 5 hidden biases, then W6^T (1,32), then b6.
# Every segment starts on a 128-lane boundary so in-kernel slices are aligned.
_BIAS_OFFS = []
_off = 0
for _d in LAYER_DIMS[:-1]:
    _BIAS_OFFS.append(_off)
    _off += _round_up(_d, LANE)
_W6T_OFF = _off
_off += LANE
_B6_OFF = _off
_off += LANE
_MISC_LEN = _off                           # = 1408


# ---------------------------------------------------------------------------
# Kernel: fused 6-layer MLP forward for one batch tile
# ---------------------------------------------------------------------------
def _mlp_kernel(x_ref, w1_ref, w2_ref, w3_ref, w4_ref, w5_ref, misc_ref, o_ref):
    """5x (bf16 matmul -> f32 acc -> +bias -> ReLU -> bf16), then a lane-dense
    32->1 final layer computed as w6^T @ h5^T on the MXU."""

    d1, d2, d3, d4, d5 = LAYER_DIMS[:-1]
    b1 = misc_ref[:, _BIAS_OFFS[0]:_BIAS_OFFS[0] + d1]
    b2 = misc_ref[:, _BIAS_OFFS[1]:_BIAS_OFFS[1] + d2]
    b3 = misc_ref[:, _BIAS_OFFS[2]:_BIAS_OFFS[2] + d3]
    b4 = misc_ref[:, _BIAS_OFFS[3]:_BIAS_OFFS[3] + d4]
    b5 = misc_ref[:, _BIAS_OFFS[4]:_BIAS_OFFS[4] + d5]
    w6t = misc_ref[:, _W6T_OFF:_W6T_OFF + d5]          # [1, 32]
    b6 = misc_ref[:, _B6_OFF:_B6_OFF + 1]              # [1, 1]

    def hidden(h, w_ref, b, out_dtype=jnp.bfloat16):
        # bf16 x bf16 -> f32 accumulation on the MXU; bias+ReLU in f32; cast.
        y = jnp.dot(h, w_ref[...], preferred_element_type=jnp.float32)
        return jnp.maximum(y + b, 0.0).astype(out_dtype)

    h = x_ref[...].astype(jnp.bfloat16)                 # [tile, F_pad]
    h = hidden(h, w1_ref, b1)
    h = hidden(h, w2_ref, b2)
    h = hidden(h, w3_ref, b3)
    h = hidden(h, w4_ref, b4)
    h5 = hidden(h, w5_ref, b5, out_dtype=jnp.float32)   # [tile, 32] f32

    # Final 32->1 layer: (w6^T) [1,32] contracted against h5 [tile,32] on its
    # last dim -> result [*, tile] is naturally lane-dense (batch along lanes).
    # Broadcast the weight row to 8 sublanes so the M dim fills a native tile.
    w6t8 = jnp.broadcast_to(w6t, (8, d5))
    y = lax.dot_general(w6t8, h5, (((1,), (1,)), ((), ())),
                        preferred_element_type=jnp.float32)   # [8, tile]
    o_ref[...] = (y[0:1, :] + b6).astype(o_ref.dtype)         # [1, tile]


# ---------------------------------------------------------------------------
# One-time parameter preparation (hoisted out of the per-call path)
# ---------------------------------------------------------------------------
def prepare_params(params):
    """Convert f32 (W [in,out], b [1,out]) params into kernel-ready operands:
    bf16 hidden weights (W1 zero-padded on its input dim to a lane multiple)
    plus one packed f32 buffer holding all biases, W6^T and b6."""
    assert len(params) == len(LAYER_DIMS)
    in_dim = params[0][0].shape[0]
    f_pad = _round_up(in_dim, LANE)

    weights = []
    for li, (w, _) in enumerate(params[:-1]):
        if li == 0 and f_pad != in_dim:
            w = jnp.pad(w, ((0, f_pad - in_dim), (0, 0)))   # zero rows: exact
        weights.append(w.astype(jnp.bfloat16))

    misc = jnp.zeros((1, _MISC_LEN), jnp.float32)
    for (_, b), off, d in zip(params[:-1], _BIAS_OFFS, LAYER_DIMS[:-1]):
        misc = misc.at[:, off:off + d].set(b.reshape(1, d).astype(jnp.float32))
    w6, b6 = params[-1]
    misc = misc.at[:, _W6T_OFF:_W6T_OFF + LAYER_DIMS[-2]].set(
        w6.reshape(1, -1).astype(jnp.float32))
    misc = misc.at[:, _B6_OFF:_B6_OFF + 1].set(b6.reshape(1, 1).astype(jnp.float32))

    return {"weights": tuple(weights), "misc": misc}


def _choose_tile(batch, batch_tile):
    b_round = _round_up(max(batch, 1), LANE)
    tile = max(LANE, min(batch_tile, b_round))
    # Keep >= 2 grid steps whenever the batch allows it, so the "parallel"
    # axis can shard across both TensorCores on v7x (near-neutral on 1-TC
    # v5e/v6e: one extra ~0.35us grid step).
    if b_round >= 2 * LANE:
        tile = min(tile, _round_up((b_round + 1) // 2, LANE))
    return tile


# ---------------------------------------------------------------------------
# Wrapper
# ---------------------------------------------------------------------------
def mlp_forward(x, prepared, batch_tile=DEFAULT_BATCH_TILE):
    """x: [B, F] float32. prepared: output of prepare_params. Returns [B, 1]."""
    B, F = x.shape
    w1, w2, w3, w4, w5 = prepared["weights"]
    misc = prepared["misc"]
    f_pad = w1.shape[0]
    assert f_pad >= F and f_pad % LANE == 0, (f_pad, F)

    x = x.astype(jnp.float32)
    if f_pad != F:
        x = jnp.pad(x, ((0, 0), (0, f_pad - F)))

    tile = _choose_tile(B, batch_tile)
    b_pad = _round_up(B, tile)
    if b_pad != B:
        x = jnp.pad(x, ((0, b_pad - B), (0, 0)))
    grid = b_pad // tile

    in_specs = [
        pl.BlockSpec((tile, f_pad), lambda i: (i, 0)),
        # Grid-invariant weights / packed misc: constant index_map, resident.
        pl.BlockSpec(w1.shape, lambda i: (0, 0)),
        pl.BlockSpec(w2.shape, lambda i: (0, 0)),
        pl.BlockSpec(w3.shape, lambda i: (0, 0)),
        pl.BlockSpec(w4.shape, lambda i: (0, 0)),
        pl.BlockSpec(w5.shape, lambda i: (0, 0)),
        pl.BlockSpec(misc.shape, lambda i: (0, 0)),
    ]
    # Lane-dense output: one (1, tile) row block per grid step.
    out_specs = pl.BlockSpec((1, tile), lambda i: (0, i))

    dims_in = [f_pad] + LAYER_DIMS[:-1]
    flops = 2 * b_pad * sum(di * do for di, do in zip(dims_in, LAYER_DIMS))
    bytes_accessed = (int(x.size) * x.dtype.itemsize
                      + sum(int(w.size) * w.dtype.itemsize
                            for w in prepared["weights"])
                      + int(misc.size) * 4
                      + b_pad * 4)
    cost = pl.CostEstimate(flops=int(flops), transcendentals=0,
                           bytes_accessed=int(bytes_accessed))

    out = pl.pallas_call(
        _mlp_kernel,
        out_shape=jax.ShapeDtypeStruct((1, b_pad), jnp.float32),
        grid_spec=pltpu.PrefetchScalarGridSpec(
            num_scalar_prefetch=0,
            grid=(grid,),
            in_specs=in_specs,
            out_specs=out_specs,
        ),
        compiler_params=pltpu.CompilerParams(
            dimension_semantics=("parallel",)),
        cost_estimate=cost,
    )(x, w1, w2, w3, w4, w5, misc)

    return out[0, :B].reshape(B, 1)


# ---------------------------------------------------------------------------
# Init + reference (mirrors kernel numerics: bf16 matmul inputs, f32 accum)
# ---------------------------------------------------------------------------
def init_params(key, input_shape):
    """Deterministic init mirroring nn.Linear default: U(-1/sqrt(fan_in), +)."""
    params = []
    in_dim = input_shape
    for out_dim in LAYER_DIMS:
        key, kw, kb = jax.random.split(key, 3)
        bound = 1.0 / jnp.sqrt(jnp.float32(in_dim))
        w = jax.random.uniform(kw, (in_dim, out_dim), jnp.float32,
                               minval=-bound, maxval=bound)
        b = jax.random.uniform(kb, (1, out_dim), jnp.float32,
                               minval=-bound, maxval=bound)
        params.append((w, b))
        in_dim = out_dim
    return params


def reference_forward(x, params):
    """Plain-JAX reference using the same bf16-in / f32-accumulate recipe."""
    h = x.astype(jnp.float32)
    n = len(params)
    for i, (w, b) in enumerate(params):
        if i < n - 1:
            h = jnp.dot(h.astype(jnp.bfloat16), w.astype(jnp.bfloat16),
                        preferred_element_type=jnp.float32) + b
            h = jnp.maximum(h, 0.0)
        else:
            h = h @ w + b      # final 32->1 layer stays f32
    return h


if __name__ == "__main__":
    key = jax.random.PRNGKey(0)
    k_x, k_p = jax.random.split(key)

    B, F = 16, 64                       # small batch / input feature size
    x = jax.random.normal(k_x, (B, F), jnp.float32)
    params = init_params(k_p, F)

    prepared = prepare_params(params)   # one-time weight prep (hoisted)
    fwd = jax.jit(mlp_forward)

    out = jax.block_until_ready(fwd(x, prepared))
    ref = reference_forward(x, params)

    assert out.shape == (B, 1), out.shape
    assert jnp.allclose(out, ref, atol=1e-2, rtol=1e-2), "mismatch vs reference"

    print("KERNEL_OK")
</pallas_src>

<mosaic_0001>
module attributes {stable_mosaic.version = 11 : i64} {
  func.func @_mlp_kernel(%arg0: i32, %arg1: memref<128x128xf32, #tpu.memory_space<vmem>>, %arg2: memref<128x128xbf16, #tpu.memory_space<vmem>>, %arg3: memref<128x256xbf16, #tpu.memory_space<vmem>>, %arg4: memref<256x512xbf16, #tpu.memory_space<vmem>>, %arg5: memref<512x128xbf16, #tpu.memory_space<vmem>>, %arg6: memref<128x32xbf16, #tpu.memory_space<vmem>>, %arg7: memref<1x1408xf32, #tpu.memory_space<vmem>>, %arg8: memref<1x128xf32, #tpu.memory_space<vmem>>) attributes {dimension_semantics = [#tpu.dimension_semantics<parallel>], iteration_bounds = array<i64: 1>, scalar_prefetch = 0 : i64, scratch_operands = 0 : i64, tpu.core_type = #tpu.core_type<tc>, window_params = [{transform_indices = @transform_0, window_bounds = array<i64: 128, 128>}, {pipeline_mode = #tpu.pipeline_mode<synchronous>, transform_indices = @transform_1, window_bounds = array<i64: 128, 128>}, {pipeline_mode = #tpu.pipeline_mode<synchronous>, transform_indices = @transform_2, window_bounds = array<i64: 128, 256>}, {pipeline_mode = #tpu.pipeline_mode<synchronous>, transform_indices = @transform_3, window_bounds = array<i64: 256, 512>}, {pipeline_mode = #tpu.pipeline_mode<synchronous>, transform_indices = @transform_4, window_bounds = array<i64: 512, 128>}, {pipeline_mode = #tpu.pipeline_mode<synchronous>, transform_indices = @transform_5, window_bounds = array<i64: 128, 32>}, {pipeline_mode = #tpu.pipeline_mode<synchronous>, transform_indices = @transform_6, window_bounds = array<i64: 1, 1408>}, {transform_indices = @transform_7, window_bounds = array<i64: 1, 128>}]} {
    %c0 = arith.constant 0 : index
    %c0_0 = arith.constant 0 : index
    %0 = vector.load %arg7[%c0, %c0_0] : memref<1x1408xf32, #tpu.memory_space<vmem>>, vector<1x128xf32>
    %c0_1 = arith.constant 0 : index
    %c128 = arith.constant 128 : index
    %1 = vector.load %arg7[%c0_1, %c128] : memref<1x1408xf32, #tpu.memory_space<vmem>>, vector<1x256xf32>
    %c0_2 = arith.constant 0 : index
    %c384 = arith.constant 384 : index
    %2 = vector.load %arg7[%c0_2, %c384] : memref<1x1408xf32, #tpu.memory_space<vmem>>, vector<1x512xf32>
    %c0_3 = arith.constant 0 : index
    %c896 = arith.constant 896 : index
    %3 = vector.load %arg7[%c0_3, %c896] : memref<1x1408xf32, #tpu.memory_space<vmem>>, vector<1x128xf32>
    %c0_4 = arith.constant 0 : index
    %c1024 = arith.constant 1024 : index
    %4 = vector.load %arg7[%c0_4, %c1024] : memref<1x1408xf32, #tpu.memory_space<vmem>>, vector<1x32xf32>
    %c0_5 = arith.constant 0 : index
    %c1152 = arith.constant 1152 : index
    %5 = vector.load %arg7[%c0_5, %c1152] : memref<1x1408xf32, #tpu.memory_space<vmem>>, vector<1x32xf32>
    %c0_6 = arith.constant 0 : index
    %c1280 = arith.constant 1280 : index
    %6 = vector.load %arg7[%c0_6, %c1280] : memref<1x1408xf32, #tpu.memory_space<vmem>>, vector<1x1xf32>
    %c0_7 = arith.constant 0 : index
    %c0_8 = arith.constant 0 : index
    %7 = vector.load %arg1[%c0_7, %c0_8] : memref<128x128xf32, #tpu.memory_space<vmem>>, vector<128x128xf32>
    %8 = arith.truncf %7 : vector<128x128xf32> to vector<128x128xbf16>
    %c0_9 = arith.constant 0 : index
    %c0_10 = arith.constant 0 : index
    %9 = vector.load %arg2[%c0_9, %c0_10] : memref<128x128xbf16, #tpu.memory_space<vmem>>, vector<128x128xbf16>
    %cst = arith.constant dense<0.000000e+00> : vector<128x128xf32>
    %10 = tpu.matmul %8, %9, %cst {dimension_numbers = #tpu.dot_dimension_numbers<[1], [0], [0], [1], [0, 0, 1, 1], [], []>} : vector<128x128xbf16>, vector<128x128xbf16>, vector<128x128xf32> -> vector<128x128xf32>
    %11 = vector.broadcast %0 : vector<1x128xf32> to vector<128x128xf32>
    %12 = arith.addf %10, %11 : vector<128x128xf32>
    %cst_11 = arith.constant 0.000000e+00 : f32
    %13 = vector.broadcast %cst_11 : f32 to vector<128x128xf32>
    %14 = arith.maximumf %12, %13 : vector<128x128xf32>
    %15 = arith.truncf %14 : vector<128x128xf32> to vector<128x128xbf16>
    %c0_12 = arith.constant 0 : index
    %c0_13 = arith.constant 0 : index
    %16 = vector.load %arg3[%c0_12, %c0_13] : memref<128x256xbf16, #tpu.memory_space<vmem>>, vector<128x256xbf16>
    %cst_14 = arith.constant dense<0.000000e+00> : vector<128x256xf32>
    %17 = tpu.matmul %15, %16, %cst_14 {dimension_numbers = #tpu.dot_dimension_numbers<[1], [0], [0], [1], [0, 0, 1, 1], [], []>} : vector<128x128xbf16>, vector<128x256xbf16>, vector<128x256xf32> -> vector<128x256xf32>
    %18 = vector.broadcast %1 : vector<1x256xf32> to vector<128x256xf32>
    %19 = arith.addf %17, %18 : vector<128x256xf32>
    %cst_15 = arith.constant 0.000000e+00 : f32
    %20 = vector.broadcast %cst_15 : f32 to vector<128x256xf32>
    %21 = arith.maximumf %19, %20 : vector<128x256xf32>
    %22 = arith.truncf %21 : vector<128x256xf32> to vector<128x256xbf16>
    %c0_16 = arith.constant 0 : index
    %c0_17 = arith.constant 0 : index
    %23 = vector.load %arg4[%c0_16, %c0_17] : memref<256x512xbf16, #tpu.memory_space<vmem>>, vector<256x512xbf16>
    %cst_18 = arith.constant dense<0.000000e+00> : vector<128x512xf32>
    %24 = tpu.matmul %22, %23, %cst_18 {dimension_numbers = #tpu.dot_dimension_numbers<[1], [0], [0], [1], [0, 0, 1, 1], [], []>} : vector<128x256xbf16>, vector<256x512xbf16>, vector<128x512xf32> -> vector<128x512xf32>
    %25 = vector.broadcast %2 : vector<1x512xf32> to vector<128x512xf32>
    %26 = arith.addf %24, %25 : vector<128x512xf32>
    %cst_19 = arith.constant 0.000000e+00 : f32
    %27 = vector.broadcast %cst_19 : f32 to vector<128x512xf32>
    %28 = arith.maximumf %26, %27 : vector<128x512xf32>
    %29 = arith.truncf %28 : vector<128x512xf32> to vector<128x512xbf16>
    %c0_20 = arith.constant 0 : index
    %c0_21 = arith.constant 0 : index
    %30 = vector.load %arg5[%c0_20, %c0_21] : memref<512x128xbf16, #tpu.memory_space<vmem>>, vector<512x128xbf16>
    %cst_22 = arith.constant dense<0.000000e+00> : vector<128x128xf32>
    %31 = tpu.matmul %29, %30, %cst_22 {dimension_numbers = #tpu.dot_dimension_numbers<[1], [0], [0], [1], [0, 0, 1, 1], [], []>} : vector<128x512xbf16>, vector<512x128xbf16>, vector<128x128xf32> -> vector<128x128xf32>
    %32 = vector.broadcast %3 : vector<1x128xf32> to vector<128x128xf32>
    %33 = arith.addf %31, %32 : vector<128x128xf32>
    %cst_23 = arith.constant 0.000000e+00 : f32
    %34 = vector.broadcast %cst_23 : f32 to vector<128x128xf32>
    %35 = arith.maximumf %33, %34 : vector<128x128xf32>
    %36 = arith.truncf %35 : vector<128x128xf32> to vector<128x128xbf16>
    %c0_24 = arith.constant 0 : index
    %c0_25 = arith.constant 0 : index
    %37 = vector.load %arg6[%c0_24, %c0_25] : memref<128x32xbf16, #tpu.memory_space<vmem>>, vector<128x32xbf16>
    %cst_26 = arith.constant dense<0.000000e+00> : vector<128x32xf32>
    %38 = tpu.matmul %36, %37, %cst_26 {dimension_numbers = #tpu.dot_dimension_numbers<[1], [0], [0], [1], [0, 0, 1, 1], [], []>} : vector<128x128xbf16>, vector<128x32xbf16>, vector<128x32xf32> -> vector<128x32xf32>
    %39 = vector.broadcast %4 : vector<1x32xf32> to vector<128x32xf32>
    %40 = arith.addf %38, %39 : vector<128x32xf32>
    %cst_27 = arith.constant 0.000000e+00 : f32
    %41 = vector.broadcast %cst_27 : f32 to vector<128x32xf32>
    %42 = arith.maximumf %40, %41 : vector<128x32xf32>
    %43 = vector.shape_cast %5 : vector<1x32xf32> to vector<1x32xf32>
    %44 = vector.broadcast %43 : vector<1x32xf32> to vector<8x32xf32>
    %cst_28 = arith.constant dense<0.000000e+00> : vector<8x128xf32>
    %45 = tpu.matmul %44, %42, %cst_28 {dimension_numbers = #tpu.dot_dimension_numbers<[1], [1], [0], [0], [0, 0, 1, 0], [], []>} : vector<8x32xf32>, vector<128x32xf32>, vector<8x128xf32> -> vector<8x128xf32>
    %46 = vector.extract_strided_slice %45 {offsets = [0, 0], sizes = [1, 128], strides = [1, 1]} : vector<8x128xf32> to vector<1x128xf32>
    %47 = vector.broadcast %6 : vector<1x1xf32> to vector<1x128xf32>
    %48 = arith.addf %46, %47 : vector<1x128xf32>
    %c0_29 = arith.constant 0 : index
    %c0_30 = arith.constant 0 : index
    %49 = vector.load %arg8[%c0_29, %c0_30] : memref<1x128xf32, #tpu.memory_space<vmem>>, vector<1x128xf32>
    tpu.vector_store %arg8[%c0_29, %c0_30], %48 {strides = array<i32>} : memref<1x128xf32, #tpu.memory_space<vmem>>, vector<1x128xf32>,
    return
  }
  func.func @transform_0(%arg0: i32) -> (i32, i32) {
    %c0_i32 = arith.constant 0 : i32
    %c0_i32_0 = arith.constant 0 : i32
    return %arg0, %c0_i32 : i32, i32
  }
  func.func @transform_1(%arg0: i32) -> (i32, i32) {
    %c0_i32 = arith.constant 0 : i32
    %c0_i32_0 = arith.constant 0 : i32
    %c0_i32_1 = arith.constant 0 : i32
    return %c0_i32, %c0_i32_0 : i32, i32
  }
  func.func @transform_2(%arg0: i32) -> (i32, i32) {
    %c0_i32 = arith.constant 0 : i32
    %c0_i32_0 = arith.constant 0 : i32
    %c0_i32_1 = arith.constant 0 : i32
    return %c0_i32, %c0_i32_0 : i32, i32
  }
  func.func @transform_3(%arg0: i32) -> (i32, i32) {
    %c0_i32 = arith.constant 0 : i32
    %c0_i32_0 = arith.constant 0 : i32
    %c0_i32_1 = arith.constant 0 : i32
    return %c0_i32, %c0_i32_0 : i32, i32
  }
  func.func @transform_4(%arg0: i32) -> (i32, i32) {
    %c0_i32 = arith.constant 0 : i32
    %c0_i32_0 = arith.constant 0 : i32
    %c0_i32_1 = arith.constant 0 : i32
    return %c0_i32, %c0_i32_0 : i32, i32
  }
  func.func @transform_5(%arg0: i32) -> (i32, i32) {
    %c0_i32 = arith.constant 0 : i32
    %c0_i32_0 = arith.constant 0 : i32
    %c0_i32_1 = arith.constant 0 : i32
    return %c0_i32, %c0_i32_0 : i32, i32
  }
  func.func @transform_6(%arg0: i32) -> (i32, i32) {
    %c0_i32 = arith.constant 0 : i32
    %c0_i32_0 = arith.constant 0 : i32
    %c0_i32_1 = arith.constant 0 : i32
    return %c0_i32, %c0_i32_0 : i32, i32
  }
  func.func @transform_7(%arg0: i32) -> (i32, i32) {
    %c0_i32 = arith.constant 0 : i32
    %c0_i32_0 = arith.constant 0 : i32
    return %c0_i32, %arg0 : i32, i32
  }
}

</mosaic_0001>

<llo_original>
// kernel: mlp_forward.1
$region0: #{mlp_forward.1}
  #allocation0 [shape = 'u32[]', space=smem, size = 0x4, offset = 0x4, fixed_abs, tag = 'smem constant byte address 0x4 - core index']
  #allocation1 [shape = 'u32[144,128]{1,0:T(1,128)}', space=vmem, size = 0x12000, scoped, tag = 'internal scratch']
  %s0 = inlined_call_operand.vmem [shape: f32[128,128], index: 0, kind: input, shape index: {}]
  %s1 = inlined_call_operand.vmem [shape: bf16[128,128], index: 1, kind: input, shape index: {}]
  %s2 = inlined_call_operand.vmem [shape: bf16[128,256], index: 2, kind: input, shape index: {}]
  %s3 = inlined_call_operand.hbm [shape: bf16[256,512], index: 3, kind: input, shape index: {}]
  %s4 = inlined_call_operand.hbm [shape: bf16[512,128], index: 4, kind: input, shape index: {}]
  %s5 = inlined_call_operand.vmem [shape: bf16[128,32], index: 5, kind: input, shape index: {}]
  %s6 = inlined_call_operand.vmem [shape: f32[1,1408], index: 6, kind: input, shape index: {}]
  %s7 = inlined_call_operand.vmem [shape: f32[1,128], index: 7, kind: output, shape index: {}]
  %s8 = sld [smem:[#allocation0]]
  $region46: #{mlp_forward.1} parent=0
    _
  %s10 = ssub.s32 1, %s8
  %s11 = scalar_select 0, %s10, %s8
  $region1: #{mlp_forward.1} parent=0
    #allocation2 [shape = 'u8[262144]{0}', space=vmem, size = 0x40000, scoped, tag = 'input window, operand 3, single buffered']
    #allocation3 [shape = 's32[1]{0}', space=sflag, size = 0x4, scoped, tag = 'scoped memory for mlp_forward.1']
    #allocation4 [shape = 'u8[131072]{0}', space=vmem, size = 0x20000, scoped, tag = 'input window, operand 4, single buffered']
    #allocation5 [shape = 's32[1]{0}', space=sflag, size = 0x4, scoped, tag = 'scoped memory for mlp_forward.1']
    %12 = vsyncpa [#allocation3], 0
    %13 = vsyncpa [#allocation5], 0
    // Predicated region
    $region2: #{mlp_forward.1} parent=1 // pred_check
      _
    $region3: #{mlp_forward.1} parent=1 // pred_check_branch
      %15 = sbr.rel (0) target = $region5
    $region4: #{mlp_forward.1} parent=1 // pred_region
      _
    $region5: #{mlp_forward.1} parent=1 // pred_fallthru
      _
    // Predicated region
    $region6: #{mlp_forward.1} parent=1 // pred_check
      _
    $region7: #{mlp_forward.1} parent=1 // pred_check_branch
      %17 = sbr.rel (0) target = $region9
    $region8: #{mlp_forward.1} parent=1 // pred_region
      _
    $region9: #{mlp_forward.1} parent=1 // pred_fallthru
      _
    // Predicated region
    $region10: #{mlp_forward.1} parent=1 // pred_check
      _
    $region11: #{mlp_forward.1} parent=1 // pred_check_branch
      %19 = sbr.rel (0) target = $region13
    $region12: #{mlp_forward.1} parent=1 // pred_region
      _
    $region13: #{mlp_forward.1} parent=1 // pred_fallthru
      _
    // Predicated region
    $region14: #{mlp_forward.1} parent=1 // pred_check
      _
    $region15: #{mlp_forward.1} parent=1 // pred_check_branch
      %21 = sbr.rel (0) target = $region17
    $region16: #{mlp_forward.1} parent=1 // pred_region
      %s23 = ssub.s32 8192, 8192
      %24 = vsyncadd [#allocation3], %s23
      %s25 = sshll.u32 [#allocation2], 4
      %s26 = int_to_ptr.vmem [resolvable:$true] %s25
      %31 = dma.hbm_to_vmem [thread:$0]  %s3, 8192, %s26, [#allocation3], 256, 256, 16
    $region17: #{mlp_forward.1} parent=1 // pred_fallthru
      _
    // Predicated region
    $region18: #{mlp_forward.1} parent=1 // pred_check
      _
    $region19: #{mlp_forward.1} parent=1 // pred_check_branch
      %33 = sbr.rel (0) target = $region21
    $region20: #{mlp_forward.1} parent=1 // pred_region
      %s35 = ssub.s32 4096, 4096
      %36 = vsyncadd [#allocation5], %s35
      %s37 = sshll.u32 [#allocation4], 4
      %s38 = int_to_ptr.vmem [resolvable:$true] %s37
      %43 = dma.hbm_to_vmem [thread:$0]  %s4, 4096, %s38, [#allocation5], 64, 64, 4
    $region21: #{mlp_forward.1} parent=1 // pred_fallthru
      _
    // Predicated region
    $region22: #{mlp_forward.1} parent=1 // pred_check
      _
    $region23: #{mlp_forward.1} parent=1 // pred_check_branch
      %45 = sbr.rel (0) target = $region25
    $region24: #{mlp_forward.1} parent=1 // pred_region
      _
    $region25: #{mlp_forward.1} parent=1 // pred_fallthru
      _
    // Predicated region
    $region26: #{mlp_forward.1} parent=1 // pred_check
      _
    $region27: #{mlp_forward.1} parent=1 // pred_check_branch
      %47 = sbr.rel (0) target = $region29
    $region28: #{mlp_forward.1} parent=1 // pred_region
      _
    $region29: #{mlp_forward.1} parent=1 // pred_fallthru
      _
    // Predicated region
    $region30: #{mlp_forward.1} parent=1 // pred_check
      _
    $region31: #{mlp_forward.1} parent=1 // pred_check_branch
      %49 = sbr.rel (0) target = $region33
    $region32: #{mlp_forward.1} parent=1 // pred_region
      %50 = dma.done [#allocation3], 8192
    $region33: #{mlp_forward.1} parent=1 // pred_fallthru
      _
    // Predicated region
    $region34: #{mlp_forward.1} parent=1 // pred_check
      _
    $region35: #{mlp_forward.1} parent=1 // pred_check_branch
      %52 = sbr.rel (0) target = $region37
    $region36: #{mlp_forward.1} parent=1 // pred_region
      %53 = dma.done [#allocation5], 4096
    $region37: #{mlp_forward.1} parent=1 // pred_fallthru
      _
    %v55 = vld [vmem:[%s6] sm:$0x1]
    %v56 = vld [vmem:[%s6 + $0x1] sm:$0x3]
    %v57 = vld [vmem:[%s6 + $0x3] sm:$0xf]
    %v58 = vld [vmem:[%s6 + $0x7] sm:$0x1]
    %v59 = vld [vmem:[%s6 + $0x8] sm:$0x1]
    %v60 = vld [vmem:[%s6 + $0x9] sm:$0x1]
    %v61 = vld [vmem:[%s6 + $0xa] sm:$0x1]
    %v62 = vld [vmem:[%s0] sm:$0xff]
    %v63 = vld [vmem:[%s0 + $0x8] sm:$0xff]
    %v64 = vld [vmem:[%s0 + $0x10] sm:$0xff]
    %v65 = vld [vmem:[%s0 + $0x18] sm:$0xff]
    %v66 = vld [vmem:[%s0 + $0x20] sm:$0xff]
    %v67 = vld [vmem:[%s0 + $0x28] sm:$0xff]
    %v68 = vld [vmem:[%s0 + $0x30] sm:$0xff]
    %v69 = vld [vmem:[%s0 + $0x38] sm:$0xff]
    %v70 = vld [vmem:[%s0 + $0x40] sm:$0xff]
    %v71 = vld [vmem:[%s0 + $0x48] sm:$0xff]
    %v72 = vld [vmem:[%s0 + $0x50] sm:$0xff]
    %v73 = vld [vmem:[%s0 + $0x58] sm:$0xff]
    %v74 = vld [vmem:[%s0 + $0x60] sm:$0xff]
    %v75 = vld [vmem:[%s0 + $0x68] sm:$0xff]
    %v76 = vld [vmem:[%s0 + $0x70] sm:$0xff]
    %v77 = vld [vmem:[%s0 + $0x78] sm:$0xff]
    %v78 = vpack.c.bf16 %v63, %v62
    %v79 = vpack.c.bf16 %v65, %v64
    %v80 = vpack.c.bf16 %v67, %v66
    %v81 = vpack.c.bf16 %v69, %v68
    %v82 = vpack.c.bf16 %v71, %v70
    %v83 = vpack.c.bf16 %v73, %v72
    %v84 = vpack.c.bf16 %v75, %v74
    %v85 = vpack.c.bf16 %v77, %v76
    %v86 = vld [vmem:[%s1] sm:$0xf]
    %v87 = vld [vmem:[%s1 + $0x4] sm:$0xf]
    %v88 = vld [vmem:[%s1 + $0x8] sm:$0xf]
    %v89 = vld [vmem:[%s1 + $0xc] sm:$0xf]
    %v90 = vld [vmem:[%s1 + $0x10] sm:$0xf]
    %v91 = vld [vmem:[%s1 + $0x14] sm:$0xf]
    %v92 = vld [vmem:[%s1 + $0x18] sm:$0xf]
    %v93 = vld [vmem:[%s1 + $0x1c] sm:$0xf]
    %v94 = vld [vmem:[%s1 + $0x20] sm:$0xf]
    %v95 = vld [vmem:[%s1 + $0x24] sm:$0xf]
    %v96 = vld [vmem:[%s1 + $0x28] sm:$0xf]
    %v97 = vld [vmem:[%s1 + $0x2c] sm:$0xf]
    %v98 = vld [vmem:[%s1 + $0x30] sm:$0xf]
    %v99 = vld [vmem:[%s1 + $0x34] sm:$0xf]
    %v100 = vld [vmem:[%s1 + $0x38] sm:$0xf]
    %v101 = vld [vmem:[%s1 + $0x3c] sm:$0xf]
    %v103 = vlaneseq
    %v104 = vshrl.u32 %v103, 7
    %v105 = vsub.s32 0, %v104
    %v106 = vrot.slane %v55, %v105
    %v124 = vunpack.c.l.b16 %v86
    %v125 = vunpack.c.l.b16 %v87
    %v126 = vunpack.c.l.b16 %v88
    %v127 = vunpack.c.l.b16 %v89
    %v128 = vunpack.c.l.b16 %v90
    %v129 = vunpack.c.l.b16 %v91
    %v130 = vunpack.c.l.b16 %v92
    %v131 = vunpack.c.l.b16 %v93
    %v132 = vunpack.c.l.b16 %v94
    %v133 = vunpack.c.l.b16 %v95
    %v134 = vunpack.c.l.b16 %v96
    %v135 = vunpack.c.l.b16 %v97
    %v136 = vunpack.c.l.b16 %v98
    %v137 = vunpack.c.l.b16 %v99
    %v138 = vunpack.c.l.b16 %v100
    %v139 = vunpack.c.l.b16 %v101
    %v140 = vpack.c.b16 %v125, %v124
    %v141 = vpack.c.b16 %v127, %v126
    %v142 = vpack.c.b16 %v129, %v128
    %v143 = vpack.c.b16 %v131, %v130
    %v144 = vpack.c.b16 %v133, %v132
    %v145 = vpack.c.b16 %v135, %v134
    %v146 = vpack.c.b16 %v137, %v136
    %v147 = vpack.c.b16 %v139, %v138
    %156 = vmatprep.subr.bf16.mxu0 0
    %157 = vmatpush1.bf16.msra.mxu0 %v147
    %158 = vmatprep.subr.bf16.mxu0 0
    %159 = vmatpush1.bf16.msra.mxu0 %v146
    %160 = vmatprep.subr.bf16.mxu0 0
    %161 = vmatpush1.bf16.msra.mxu0 %v145
    %162 = vmatprep.subr.bf16.mxu0 0
    %163 = vmatpush1.bf16.msra.mxu0 %v144
    %164 = vmatprep.subr.bf16.mxu0 0
    %165 = vmatpush1.bf16.msra.mxu0 %v143
    %166 = vmatprep.subr.bf16.mxu0 0
    %167 = vmatpush1.bf16.msra.mxu0 %v142
    %168 = vmatprep.subr.bf16.mxu0 0
    %169 = vmatpush1.bf16.msra.mxu0 %v141
    %170 = vmatprep.subr.bf16.mxu0 0
    %171 = vmatpush1.bf16.msra.mxu0 %v140
    %172 = vmatprep.subr.bf16.mxu0 0
    %173 = vmatpush2.bf16.msra.mxu0 0
    %174 = vmatprep.subr.bf16.mxu0 0
    %175 = vmatpush2.bf16.msra.mxu0 0
    %176 = vmatprep.subr.bf16.mxu0 0
    %177 = vmatpush2.bf16.msra.mxu0 0
    %178 = vmatprep.subr.bf16.mxu0 0
    %179 = vmatpush2.bf16.msra.mxu0 0
    %180 = vmatprep.subr.bf16.mxu0 0
    %181 = vmatpush2.bf16.msra.mxu0 0
    %182 = vmatprep.subr.bf16.mxu0 0
    %183 = vmatpush2.bf16.msra.mxu0 0
    %184 = vmatprep.subr.bf16.mxu0 0
    %185 = vmatpush2.bf16.msra.mxu0 0
    %186 = vmatprep.subr.bf16.mxu0 0
    %187 = vmatpush2.bf16.msra.mxu0 0
    %188 = vmatprep.mubr.bf16.mxu0 0
    %189 = vmatmul.mubr.bf16.gmra.mxu0 %v78
    %v190 = vpop.f32.mrf.mxu0
    %v191 = vadd.f32 %v106, %v190
    %v192 = vpop.f32.mrf.mxu0
    %v193 = vpop.f32.mrf.mxu0
    %v194 = vadd.f32 %v106, %v193
    %v195 = vpop.f32.mrf.mxu0
    %196 = vmatprep.mubr.bf16.mxu0 0
    %197 = vmatmul.mubr.bf16.gmra.mxu0 %v79
    %v198 = vpop.f32.mrf.mxu0
    %v199 = vadd.f32 %v106, %v198
    %v200 = vpop.f32.mrf.mxu0
    %v201 = vpop.f32.mrf.mxu0
    %v202 = vadd.f32 %v106, %v201
    %v203 = vpop.f32.mrf.mxu0
    %204 = vmatprep.mubr.bf16.mxu0 0
    %205 = vmatmul.mubr.bf16.gmra.mxu0 %v80
    %v206 = vpop.f32.mrf.mxu0
    %v207 = vadd.f32 %v106, %v206
    %v208 = vpop.f32.mrf.mxu0
    %v209 = vpop.f32.mrf.mxu0
    %v210 = vadd.f32 %v106, %v209
    %v211 = vpop.f32.mrf.mxu0
    %212 = vmatprep.mubr.bf16.mxu0 0
    %213 = vmatmul.mubr.bf16.gmra.mxu0 %v81
    %v214 = vpop.f32.mrf.mxu0
    %v215 = vadd.f32 %v106, %v214
    %v216 = vpop.f32.mrf.mxu0
    %v217 = vpop.f32.mrf.mxu0
    %v218 = vadd.f32 %v106, %v217
    %v219 = vpop.f32.mrf.mxu0
    %220 = vmatprep.mubr.bf16.mxu0 0
    %221 = vmatmul.mubr.bf16.gmra.mxu0 %v82
    %v222 = vpop.f32.mrf.mxu0
    %v223 = vadd.f32 %v106, %v222
    %v224 = vpop.f32.mrf.mxu0
    %v225 = vpop.f32.mrf.mxu0
    %v226 = vadd.f32 %v106, %v225
    %v227 = vpop.f32.mrf.mxu0
    %228 = vmatprep.mubr.bf16.mxu0 0
    %229 = vmatmul.mubr.bf16.gmra.mxu0 %v83
    %v230 = vpop.f32.mrf.mxu0
    %v231 = vadd.f32 %v106, %v230
    %v232 = vpop.f32.mrf.mxu0
    %v233 = vpop.f32.mrf.mxu0
    %v234 = vadd.f32 %v106, %v233
    %v235 = vpop.f32.mrf.mxu0
    %236 = vmatprep.mubr.bf16.mxu0 0
    %237 = vmatmul.mubr.bf16.gmra.mxu0 %v84
    %v238 = vpop.f32.mrf.mxu0
    %v239 = vadd.f32 %v106, %v238
    %v240 = vpop.f32.mrf.mxu0
    %v241 = vpop.f32.mrf.mxu0
    %v242 = vadd.f32 %v106, %v241
    %v243 = vpop.f32.mrf.mxu0
    %244 = vmatprep.mubr.bf16.mxu0 0
    %245 = vmatmul.mubr.bf16.gmra.mxu0 %v85
    %v246 = vpop.f32.mrf.mxu0
    %v247 = vadd.f32 %v106, %v246
    %v248 = vpop.f32.mrf.mxu0
    %v249 = vpop.f32.mrf.mxu0
    %v250 = vadd.f32 %v106, %v249
    %v251 = vpop.f32.mrf.mxu0
    %252 = vdwg.mxu0
    %v253 = vmax.f32 %v191, 0.0
    %v254 = vmax.f32 %v194, 0.0
    %v255 = vmax.f32 %v199, 0.0
    %v256 = vmax.f32 %v202, 0.0
    %v257 = vmax.f32 %v207, 0.0
    %v258 = vmax.f32 %v210, 0.0
    %v259 = vmax.f32 %v215, 0.0
    %v260 = vmax.f32 %v218, 0.0
    %v261 = vmax.f32 %v223, 0.0
    %v262 = vmax.f32 %v226, 0.0
    %v263 = vmax.f32 %v231, 0.0
    %v264 = vmax.f32 %v234, 0.0
    %v265 = vmax.f32 %v239, 0.0
    %v266 = vmax.f32 %v242, 0.0
    %v267 = vmax.f32 %v247, 0.0
    %v268 = vmax.f32 %v250, 0.0
    %v269 = vpack.c.bf16 %v254, %v253
    %v270 = vpack.c.bf16 %v256, %v255
    %v271 = vpack.c.bf16 %v258, %v257
    %v272 = vpack.c.bf16 %v260, %v259
    %v273 = vpack.c.bf16 %v262, %v261
    %v274 = vpack.c.bf16 %v264, %v263
    %v275 = vpack.c.bf16 %v266, %v265
    %v276 = vpack.c.bf16 %v268, %v267
    %v277 = vld [vmem:[%s2] sm:$0xff]
    %v278 = vld [vmem:[%s2 + $0x8] sm:$0xff]
    %v279 = vld [vmem:[%s2 + $0x10] sm:$0xff]
    %v280 = vld [vmem:[%s2 + $0x18] sm:$0xff]
    %v281 = vld [vmem:[%s2 + $0x20] sm:$0xff]
    %v282 = vld [vmem:[%s2 + $0x28] sm:$0xff]
    %v283 = vld [vmem:[%s2 + $0x30] sm:$0xff]
    %v284 = vld [vmem:[%s2 + $0x38] sm:$0xff]
    %v285 = vld [vmem:[%s2 + $0x40] sm:$0xff]
    %v286 = vld [vmem:[%s2 + $0x48] sm:$0xff]
    %v287 = vld [vmem:[%s2 + $0x50] sm:$0xff]
    %v288 = vld [vmem:[%s2 + $0x58] sm:$0xff]
    %v289 = vld [vmem:[%s2 + $0x60] sm:$0xff]
    %v290 = vld [vmem:[%s2 + $0x68] sm:$0xff]
    %v291 = vld [vmem:[%s2 + $0x70] sm:$0xff]
    %v292 = vld [vmem:[%s2 + $0x78] sm:$0xff]
    %v294 = vlaneseq
    %v295 = vshrl.u32 %v294, 7
    %v296 = vsub.s32 0, %v295
    %v297 = vrot.slane %v56, %v296
    %v298 = vlaneseq
    %v299 = vshrl.u32 %v298, 7
    %v300 = vsub.s32 1, %v299
    %v301 = vrot.slane %v56, %v300
    %v320 = vunpack.c.l.b16 %v277
    %v321 = vunpack.c.h.b16 %v277
    %v322 = vunpack.c.l.b16 %v278
    %v323 = vunpack.c.h.b16 %v278
    %v324 = vunpack.c.l.b16 %v279
    %v325 = vunpack.c.h.b16 %v279
    %v326 = vunpack.c.l.b16 %v280
    %v327 = vunpack.c.h.b16 %v280
    %v328 = vunpack.c.l.b16 %v281
    %v329 = vunpack.c.h.b16 %v281
    %v330 = vunpack.c.l.b16 %v282
    %v331 = vunpack.c.h.b16 %v282
    %v332 = vunpack.c.l.b16 %v283
    %v333 = vunpack.c.h.b16 %v283
    %v334 = vunpack.c.l.b16 %v284
    %v335 = vunpack.c.h.b16 %v284
    %v336 = vunpack.c.l.b16 %v285
    %v337 = vunpack.c.h.b16 %v285
    %v338 = vunpack.c.l.b16 %v286
    %v339 = vunpack.c.h.b16 %v286
    %v340 = vunpack.c.l.b16 %v287
    %v341 = vunpack.c.h.b16 %v287
    %v342 = vunpack.c.l.b16 %v288
    %v343 = vunpack.c.h.b16 %v288
    %v344 = vunpack.c.l.b16 %v289
    %v345 = vunpack.c.h.b16 %v289
    %v346 = vunpack.c.l.b16 %v290
    %v347 = vunpack.c.h.b16 %v290
    %v348 = vunpack.c.l.b16 %v291
    %v349 = vunpack.c.h.b16 %v291
    %v350 = vunpack.c.l.b16 %v292
    %v351 = vunpack.c.h.b16 %v292
    %v352 = vpack.c.b16 %v322, %v320
    %v353 = vpack.c.b16 %v323, %v321
    %v354 = vpack.c.b16 %v326, %v324
    %v355 = vpack.c.b16 %v327, %v325
    %v356 = vpack.c.b16 %v330, %v328
    %v357 = vpack.c.b16 %v331, %v329
    %v358 = vpack.c.b16 %v334, %v332
    %v359 = vpack.c.b16 %v335, %v333
    %v360 = vpack.c.b16 %v338, %v336
    %v361 = vpack.c.b16 %v339, %v337
    %v362 = vpack.c.b16 %v342, %v340
    %v363 = vpack.c.b16 %v343, %v341
    %v364 = vpack.c.b16 %v346, %v344
    %v365 = vpack.c.b16 %v347, %v345
    %v366 = vpack.c.b16 %v350, %v348
    %v367 = vpack.c.b16 %v351, %v349
    %384 = vmatprep.subr.bf16.mxu0 %v367
    %385 = vmatpush1.bf16.msra.mxu0 %v366
    %386 = vmatprep.subr.bf16.mxu0 %v365
    %387 = vmatpush1.bf16.msra.mxu0 %v364
    %388 = vmatprep.subr.bf16.mxu0 %v363
    %389 = vmatpush1.bf16.msra.mxu0 %v362
    %390 = vmatprep.subr.bf16.mxu0 %v361
    %391 = vmatpush1.bf16.msra.mxu0 %v360
    %392 = vmatprep.subr.bf16.mxu0 %v359
    %393 = vmatpush1.bf16.msra.mxu0 %v358
    %394 = vmatprep.subr.bf16.mxu0 %v357
    %395 = vmatpush1.bf16.msra.mxu0 %v356
    %396 = vmatprep.subr.bf16.mxu0 %v355
    %397 = vmatpush1.bf16.msra.mxu0 %v354
    %398 = vmatprep.subr.bf16.mxu0 %v353
    %399 = vmatpush1.bf16.msra.mxu0 %v352
    %400 = vmatprep.subr.bf16.mxu0 0
    %401 = vmatpush2.bf16.msra.mxu0 0
    %402 = vmatprep.subr.bf16.mxu0 0
    %403 = vmatpush2.bf16.msra.mxu0 0
    %404 = vmatprep.subr.bf16.mxu0 0
    %405 = vmatpush2.bf16.msra.mxu0 0
    %406 = vmatprep.subr.bf16.mxu0 0
    %407 = vmatpush2.bf16.msra.mxu0 0
    %408 = vmatprep.subr.bf16.mxu0 0
    %409 = vmatpush2.bf16.msra.mxu0 0
    %410 = vmatprep.subr.bf16.mxu0 0
    %411 = vmatpush2.bf16.msra.mxu0 0
    %412 = vmatprep.subr.bf16.mxu0 0
    %413 = vmatpush2.bf16.msra.mxu0 0
    %414 = vmatprep.subr.bf16.mxu0 0
    %415 = vmatpush2.bf16.msra.mxu0 0
    %416 = vmatprep.mubr.bf16.mxu0 0
    %417 = vmatmul.mubr.bf16.gmra.mxu0 %v269
    %v418 = vpop.f32.mrf.mxu0
    %v419 = vadd.f32 %v297, %v418
    %v420 = vpop.f32.mrf.mxu0
    %v421 = vadd.f32 %v301, %v420
    %v422 = vpop.f32.mrf.mxu0
    %v423 = vadd.f32 %v297, %v422
    %v424 = vpop.f32.mrf.mxu0
    %v425 = vadd.f32 %v301, %v424
    %426 = vmatprep.mubr.bf16.mxu0 0
    %427 = vmatmul.mubr.bf16.gmra.mxu0 %v270
    %v428 = vpop.f32.mrf.mxu0
    %v429 = vadd.f32 %v297, %v428
    %v430 = vpop.f32.mrf.mxu0
    %v431 = vadd.f32 %v301, %v430
    %v432 = vpop.f32.mrf.mxu0
    %v433 = vadd.f32 %v297, %v432
    %v434 = vpop.f32.mrf.mxu0
    %v435 = vadd.f32 %v301, %v434
    %436 = vmatprep.mubr.bf16.mxu0 0
    %437 = vmatmul.mubr.bf16.gmra.mxu0 %v271
    %v438 = vpop.f32.mrf.mxu0
    %v439 = vadd.f32 %v297, %v438
    %v440 = vpop.f32.mrf.mxu0
    %v441 = vadd.f32 %v301, %v440
    %v442 = vpop.f32.mrf.mxu0
    %v443 = vadd.f32 %v297, %v442
    %v444 = vpop.f32.mrf.mxu0
    %v445 = vadd.f32 %v301, %v444
    %446 = vmatprep.mubr.bf16.mxu0 0
    %447 = vmatmul.mubr.bf16.gmra.mxu0 %v272
    %v448 = vpop.f32.mrf.mxu0
    %v449 = vadd.f32 %v297, %v448
    %v450 = vpop.f32.mrf.mxu0
    %v451 = vadd.f32 %v301, %v450
    %v452 = vpop.f32.mrf.mxu0
    %v453 = vadd.f32 %v297, %v452
    %v454 = vpop.f32.mrf.mxu0
    %v455 = vadd.f32 %v301, %v454
    %456 = vmatprep.mubr.bf16.mxu0 0
    %457 = vmatmul.mubr.bf16.gmra.mxu0 %v273
    %v458 = vpop.f32.mrf.mxu0
    %v459 = vadd.f32 %v297, %v458
    %v460 = vpop.f32.mrf.mxu0
    %v461 = vadd.f32 %v301, %v460
    %v462 = vpop.f32.mrf.mxu0
    %v463 = vadd.f32 %v297, %v462
    %v464 = vpop.f32.mrf.mxu0
    %v465 = vadd.f32 %v301, %v464
    %466 = vmatprep.mubr.bf16.mxu0 0
    %467 = vmatmul.mubr.bf16.gmra.mxu0 %v274
    %v468 = vpop.f32.mrf.mxu0
    %v469 = vadd.f32 %v297, %v468
    %v470 = vpop.f32.mrf.mxu0
    %v471 = vadd.f32 %v301, %v470
    %v472 = vpop.f32.mrf.mxu0
    %v473 = vadd.f32 %v297, %v472
    %v474 = vpop.f32.mrf.mxu0
    %v475 = vadd.f32 %v301, %v474
    %476 = vmatprep.mubr.bf16.mxu0 0
    %477 = vmatmul.mubr.bf16.gmra.mxu0 %v275
    %v478 = vpop.f32.mrf.mxu0
    %v479 = vadd.f32 %v297, %v478
    %v480 = vpop.f32.mrf.mxu0
    %v481 = vadd.f32 %v301, %v480
    %v482 = vpop.f32.mrf.mxu0
    %v483 = vadd.f32 %v297, %v482
    %v484 = vpop.f32.mrf.mxu0
    %v485 = vadd.f32 %v301, %v484
    %486 = vmatprep.mubr.bf16.mxu0 0
    %487 = vmatmul.mubr.bf16.gmra.mxu0 %v276
    %v488 = vpop.f32.mrf.mxu0
    %v489 = vadd.f32 %v297, %v488
    %v490 = vpop.f32.mrf.mxu0
    %v491 = vadd.f32 %v301, %v490
    %v492 = vpop.f32.mrf.mxu0
    %v493 = vadd.f32 %v297, %v492
    %v494 = vpop.f32.mrf.mxu0
    %v495 = vadd.f32 %v301, %v494
    %496 = vdwg.mxu0
    %v497 = vmax.f32 %v419, 0.0
    %v498 = vmax.f32 %v421, 0.0
    %v499 = vmax.f32 %v423, 0.0
    %v500 = vmax.f32 %v425, 0.0
    %v501 = vmax.f32 %v429, 0.0
    %v502 = vmax.f32 %v431, 0.0
    %v503 = vmax.f32 %v433, 0.0
    %v504 = vmax.f32 %v435, 0.0
    %v505 = vmax.f32 %v439, 0.0
    %v506 = vmax.f32 %v441, 0.0
    %v507 = vmax.f32 %v443, 0.0
    %v508 = vmax.f32 %v445, 0.0
    %v509 = vmax.f32 %v449, 0.0
    %v510 = vmax.f32 %v451, 0.0
    %v511 = vmax.f32 %v453, 0.0
    %v512 = vmax.f32 %v455, 0.0
    %v513 = vmax.f32 %v459, 0.0
    %v514 = vmax.f32 %v461, 0.0
    %v515 = vmax.f32 %v463, 0.0
    %v516 = vmax.f32 %v465, 0.0
    %v517 = vmax.f32 %v469, 0.0
    %v518 = vmax.f32 %v471, 0.0
    %v519 = vmax.f32 %v473, 0.0
    %v520 = vmax.f32 %v475, 0.0
    %v521 = vmax.f32 %v479, 0.0
    %v522 = vmax.f32 %v481, 0.0
    %v523 = vmax.f32 %v483, 0.0
    %v524 = vmax.f32 %v485, 0.0
    %v525 = vmax.f32 %v489, 0.0
    %v526 = vmax.f32 %v491, 0.0
    %v527 = vmax.f32 %v493, 0.0
    %v528 = vmax.f32 %v495, 0.0
    %v529 = vpack.c.bf16 %v499, %v497
    %v530 = vpack.c.bf16 %v500, %v498
    %v531 = vpack.c.bf16 %v503, %v501
    %v532 = vpack.c.bf16 %v504, %v502
    %v533 = vpack.c.bf16 %v507, %v505
    %v534 = vpack.c.bf16 %v508, %v506
    %v535 = vpack.c.bf16 %v511, %v509
    %v536 = vpack.c.bf16 %v512, %v510
    %v537 = vpack.c.bf16 %v515, %v513
    %v538 = vpack.c.bf16 %v516, %v514
    %v539 = vpack.c.bf16 %v519, %v517
    %v540 = vpack.c.bf16 %v520, %v518
    %v541 = vpack.c.bf16 %v523, %v521
    %v542 = vpack.c.bf16 %v524, %v522
    %v543 = vpack.c.bf16 %v527, %v525
    %v544 = vpack.c.bf16 %v528, %v526
    %v545 = vld [vmem:[#allocation2] sm:$0xff]
    %v546 = vld [vmem:[#allocation2 + $0x8] sm:$0xff]
    %v547 = vld [vmem:[#allocation2 + $0x10] sm:$0xff]
    %v548 = vld [vmem:[#allocation2 + $0x18] sm:$0xff]
    %v549 = vld [vmem:[#allocation2 + $0x20] sm:$0xff]
    %v550 = vld [vmem:[#allocation2 + $0x28] sm:$0xff]
    %v551 = vld [vmem:[#allocation2 + $0x30] sm:$0xff]
    %v552 = vld [vmem:[#allocation2 + $0x38] sm:$0xff]
    %v553 = vld [vmem:[#allocation2 + $0x40] sm:$0xff]
    %v554 = vld [vmem:[#allocation2 + $0x48] sm:$0xff]
    %v555 = vld [vmem:[#allocation2 + $0x50] sm:$0xff]
    %v556 = vld [vmem:[#allocation2 + $0x58] sm:$0xff]
    %v557 = vld [vmem:[#allocation2 + $0x60] sm:$0xff]
    %v558 = vld [vmem:[#allocation2 + $0x68] sm:$0xff]
    %v559 = vld [vmem:[#allocation2 + $0x70] sm:$0xff]
    %v560 = vld [vmem:[#allocation2 + $0x78] sm:$0xff]
    %v561 = vld [vmem:[#allocation2 + $0x80] sm:$0xff]
    %v562 = vld [vmem:[#allocation2 + $0x88] sm:$0xff]
    %v563 = vld [vmem:[#allocation2 + $0x90] sm:$0xff]
    %v564 = vld [vmem:[#allocation2 + $0x98] sm:$0xff]
    %v565 = vld [vmem:[#allocation2 + $0xa0] sm:$0xff]
    %v566 = vld [vmem:[#allocation2 + $0xa8] sm:$0xff]
    %v567 = vld [vmem:[#allocation2 + $0xb0] sm:$0xff]
    %v568 = vld [vmem:[#allocation2 + $0xb8] sm:$0xff]
    %v569 = vld [vmem:[#allocation2 + $0xc0] sm:$0xff]
    %v570 = vld [vmem:[#allocation2 + $0xc8] sm:$0xff]
    %v571 = vld [vmem:[#allocation2 + $0xd0] sm:$0xff]
    %v572 = vld [vmem:[#allocation2 + $0xd8] sm:$0xff]
    %v573 = vld [vmem:[#allocation2 + $0xe0] sm:$0xff]
    %v574 = vld [vmem:[#allocation2 + $0xe8] sm:$0xff]
    %v575 = vld [vmem:[#allocation2 + $0xf0] sm:$0xff]
    %v576 = vld [vmem:[#allocation2 + $0xf8] sm:$0xff]
    %v577 = vld [vmem:[#allocation2 + $0x100] sm:$0xff]
    %v578 = vld [vmem:[#allocation2 + $0x108] sm:$0xff]
    %v579 = vld [vmem:[#allocation2 + $0x110] sm:$0xff]
    %v580 = vld [vmem:[#allocation2 + $0x118] sm:$0xff]
    %v581 = vld [vmem:[#allocation2 + $0x120] sm:$0xff]
    %v582 = vld [vmem:[#allocation2 + $0x128] sm:$0xff]
    %v583 = vld [vmem:[#allocation2 + $0x130] sm:$0xff]
    %v584 = vld [vmem:[#allocation2 + $0x138] sm:$0xff]
    %v585 = vld [vmem:[#allocation2 + $0x140] sm:$0xff]
    %v586 = vld [vmem:[#allocation2 + $0x148] sm:$0xff]
    %v587 = vld [vmem:[#allocation2 + $0x150] sm:$0xff]
    %v588 = vld [vmem:[#allocation2 + $0x158] sm:$0xff]
    %v589 = vld [vmem:[#allocation2 + $0x160] sm:$0xff]
    %v590 = vld [vmem:[#allocation2 + $0x168] sm:$0xff]
    %v591 = vld [vmem:[#allocation2 + $0x170] sm:$0xff]
    %v592 = vld [vmem:[#allocation2 + $0x178] sm:$0xff]
    %v593 = vld [vmem:[#allocation2 + $0x180] sm:$0xff]
    %v594 = vld [vmem:[#allocation2 + $0x188] sm:$0xff]
    %v595 = vld [vmem:[#allocation2 + $0x190] sm:$0xff]
    %v596 = vld [vmem:[#allocation2 + $0x198] sm:$0xff]
    %v597 = vld [vmem:[#allocation2 + $0x1a0] sm:$0xff]
    %v598 = vld [vmem:[#allocation2 + $0x1a8] sm:$0xff]
    %v599 = vld [vmem:[#allocation2 + $0x1b0] sm:$0xff]
    %v600 = vld [vmem:[#allocation2 + $0x1b8] sm:$0xff]
    %v601 = vld [vmem:[#allocation2 + $0x1c0] sm:$0xff]
    %v602 = vld [vmem:[#allocation2 + $0x1c8] sm:$0xff]
    %v603 = vld [vmem:[#allocation2 + $0x1d0] sm:$0xff]
    %v604 = vld [vmem:[#allocation2 + $0x1d8] sm:$0xff]
    %v605 = vld [vmem:[#allocation2 + $0x1e0] sm:$0xff]
    %v606 = vld [vmem:[#allocation2 + $0x1e8] sm:$0xff]
    %v607 = vld [vmem:[#allocation2 + $0x1f0] sm:$0xff]
    %v608 = vld [vmem:[#allocation2 + $0x1f8] sm:$0xff]
    %v610 = vlaneseq
    %v611 = vshrl.u32 %v610, 7
    %v612 = vsub.s32 0, %v611
    %v613 = vrot.slane %v57, %v612
    %v614 = vlaneseq
    %v615 = vshrl.u32 %v614, 7
    %v616 = vsub.s32 1, %v615
    %v617 = vrot.slane %v57, %v616
    %v618 = vlaneseq
    %v619 = vshrl.u32 %v618, 7
    %v620 = vsub.s32 2, %v619
    %v621 = vrot.slane %v57, %v620
    %v622 = vlaneseq
    %v623 = vshrl.u32 %v622, 7
    %v624 = vsub.s32 3, %v623
    %v625 = vrot.slane %v57, %v624
    %v694 = vunpack.c.l.b16 %v545
    %v695 = vunpack.c.h.b16 %v545
    %v696 = vunpack.c.l.b16 %v546
    %v697 = vunpack.c.h.b16 %v546
    %v698 = vunpack.c.l.b16 %v547
    %v699 = vunpack.c.h.b16 %v547
    %v700 = vunpack.c.l.b16 %v548
    %v701 = vunpack.c.h.b16 %v548
    %v702 = vunpack.c.l.b16 %v549
    %v703 = vunpack.c.h.b16 %v549
    %v704 = vunpack.c.l.b16 %v550
    %v705 = vunpack.c.h.b16 %v550
    %v706 = vunpack.c.l.b16 %v551
    %v707 = vunpack.c.h.b16 %v551
    %v708 = vunpack.c.l.b16 %v552
    %v709 = vunpack.c.h.b16 %v552
    %v710 = vunpack.c.l.b16 %v553
    %v711 = vunpack.c.h.b16 %v553
    %v712 = vunpack.c.l.b16 %v554
    %v713 = vunpack.c.h.b16 %v554
    %v714 = vunpack.c.l.b16 %v555
    %v715 = vunpack.c.h.b16 %v555
    %v716 = vunpack.c.l.b16 %v556
    %v717 = vunpack.c.h.b16 %v556
    %v718 = vunpack.c.l.b16 %v557
    %v719 = vunpack.c.h.b16 %v557
    %v720 = vunpack.c.l.b16 %v558
    %v721 = vunpack.c.h.b16 %v558
    %v722 = vunpack.c.l.b16 %v559
    %v723 = vunpack.c.h.b16 %v559
    %v724 = vunpack.c.l.b16 %v560
    %v725 = vunpack.c.h.b16 %v560
    %v726 = vunpack.c.l.b16 %v561
    %v727 = vunpack.c.h.b16 %v561
    %v728 = vunpack.c.l.b16 %v562
    %v729 = vunpack.c.h.b16 %v562
    %v730 = vunpack.c.l.b16 %v563
    %v731 = vunpack.c.h.b16 %v563
    %v732 = vunpack.c.l.b16 %v564
    %v733 = vunpack.c.h.b16 %v564
    %v734 = vunpack.c.l.b16 %v565
    %v735 = vunpack.c.h.b16 %v565
    %v736 = vunpack.c.l.b16 %v566
    %v737 = vunpack.c.h.b16 %v566
    %v738 = vunpack.c.l.b16 %v567
    %v739 = vunpack.c.h.b16 %v567
    %v740 = vunpack.c.l.b16 %v568
    %v741 = vunpack.c.h.b16 %v568
    %v742 = vunpack.c.l.b16 %v569
    %v743 = vunpack.c.h.b16 %v569
    %v744 = vunpack.c.l.b16 %v570
    %v745 = vunpack.c.h.b16 %v570
    %v746 = vunpack.c.l.b16 %v571
    %v747 = vunpack.c.h.b16 %v571
    %v748 = vunpack.c.l.b16 %v572
    %v749 = vunpack.c.h.b16 %v572
    %v750 = vunpack.c.l.b16 %v573
    %v751 = vunpack.c.h.b16 %v573
    %v752 = vunpack.c.l.b16 %v574
    %v753 = vunpack.c.h.b16 %v574
    %v754 = vunpack.c.l.b16 %v575
    %v755 = vunpack.c.h.b16 %v575
    %v756 = vunpack.c.l.b16 %v576
    %v757 = vunpack.c.h.b16 %v576
    %v758 = vunpack.c.l.b16 %v577
    %v759 = vunpack.c.h.b16 %v577
    %v760 = vunpack.c.l.b16 %v578
    %v761 = vunpack.c.h.b16 %v578
    %v762 = vunpack.c.l.b16 %v579
    %v763 = vunpack.c.h.b16 %v579
    %v764 = vunpack.c.l.b16 %v580
    %v765 = vunpack.c.h.b16 %v580
    %v766 = vunpack.c.l.b16 %v581
    %v767 = vunpack.c.h.b16 %v581
    %v768 = vunpack.c.l.b16 %v582
    %v769 = vunpack.c.h.b16 %v582
    %v770 = vunpack.c.l.b16 %v583
    %v771 = vunpack.c.h.b16 %v583
    %v772 = vunpack.c.l.b16 %v584
    %v773 = vunpack.c.h.b16 %v584
    %v774 = vunpack.c.l.b16 %v585
    %v775 = vunpack.c.h.b16 %v585
    %v776 = vunpack.c.l.b16 %v586
    %v777 = vunpack.c.h.b16 %v586
    %v778 = vunpack.c.l.b16 %v587
    %v779 = vunpack.c.h.b16 %v587
    %v780 = vunpack.c.l.b16 %v588
    %v781 = vunpack.c.h.b16 %v588
    %v782 = vunpack.c.l.b16 %v589
    %v783 = vunpack.c.h.b16 %v589
    %v784 = vunpack.c.l.b16 %v590
    %v785 = vunpack.c.h.b16 %v590
    %v786 = vunpack.c.l.b16 %v591
    %v787 = vunpack.c.h.b16 %v591
    %v788 = vunpack.c.l.b16 %v592
    %v789 = vunpack.c.h.b16 %v592
    %v790 = vunpack.c.l.b16 %v593
    %v791 = vunpack.c.h.b16 %v593
    %v792 = vunpack.c.l.b16 %v594
    %v793 = vunpack.c.h.b16 %v594
    %v794 = vunpack.c.l.b16 %v595
    %v795 = vunpack.c.h.b16 %v595
    %v796 = vunpack.c.l.b16 %v596
    %v797 = vunpack.c.h.b16 %v596
    %v798 = vunpack.c.l.b16 %v597
    %v799 = vunpack.c.h.b16 %v597
    %v800 = vunpack.c.l.b16 %v598
    %v801 = vunpack.c.h.b16 %v598
    %v802 = vunpack.c.l.b16 %v599
    %v803 = vunpack.c.h.b16 %v599
    %v804 = vunpack.c.l.b16 %v600
    %v805 = vunpack.c.h.b16 %v600
    %v806 = vunpack.c.l.b16 %v601
    %v807 = vunpack.c.h.b16 %v601
    %v808 = vunpack.c.l.b16 %v602
    %v809 = vunpack.c.h.b16 %v602
    %v810 = vunpack.c.l.b16 %v603
    %v811 = vunpack.c.h.b16 %v603
    %v812 = vunpack.c.l.b16 %v604
    %v813 = vunpack.c.h.b16 %v604
    %v814 = vunpack.c.l.b16 %v605
    %v815 = vunpack.c.h.b16 %v605
    %v816 = vunpack.c.l.b16 %v606
    %v817 = vunpack.c.h.b16 %v606
    %v818 = vunpack.c.l.b16 %v607
    %v819 = vunpack.c.h.b16 %v607
    %v820 = vunpack.c.l.b16 %v608
    %v821 = vunpack.c.h.b16 %v608
    %v822 = vpack.c.b16 %v698, %v694
    %v823 = vpack.c.b16 %v699, %v695
    %v824 = vpack.c.b16 %v700, %v696
    %v825 = vpack.c.b16 %v701, %v697
    %v826 = vpack.c.b16 %v706, %v702
    %v827 = vpack.c.b16 %v707, %v703
    %v828 = vpack.c.b16 %v708, %v704
    %v829 = vpack.c.b16 %v709, %v705
    %v830 = vpack.c.b16 %v714, %v710
    %v831 = vpack.c.b16 %v715, %v711
    %v832 = vpack.c.b16 %v716, %v712
    %v833 = vpack.c.b16 %v717, %v713
    %v834 = vpack.c.b16 %v722, %v718
    %v835 = vpack.c.b16 %v723, %v719
    %v836 = vpack.c.b16 %v724, %v720
    %v837 = vpack.c.b16 %v725, %v721
    %v838 = vpack.c.b16 %v730, %v726
    %v839 = vpack.c.b16 %v731, %v727
    %v840 = vpack.c.b16 %v732, %v728
    %v841 = vpack.c.b16 %v733, %v729
    %v842 = vpack.c.b16 %v738, %v734
    %v843 = vpack.c.b16 %v739, %v735
    %v844 = vpack.c.b16 %v740, %v736
    %v845 = vpack.c.b16 %v741, %v737
    %v846 = vpack.c.b16 %v746, %v742
    %v847 = vpack.c.b16 %v747, %v743
    %v848 = vpack.c.b16 %v748, %v744
    %v849 = vpack.c.b16 %v749, %v745
    %v850 = vpack.c.b16 %v754, %v750
    %v851 = vpack.c.b16 %v755, %v751
    %v852 = vpack.c.b16 %v756, %v752
    %v853 = vpack.c.b16 %v757, %v753
    %v854 = vpack.c.b16 %v762, %v758
    %v855 = vpack.c.b16 %v763, %v759
    %v856 = vpack.c.b16 %v764, %v760
    %v857 = vpack.c.b16 %v765, %v761
    %v858 = vpack.c.b16 %v770, %v766
    %v859 = vpack.c.b16 %v771, %v767
    %v860 = vpack.c.b16 %v772, %v768
    %v861 = vpack.c.b16 %v773, %v769
    %v862 = vpack.c.b16 %v778, %v774
    %v863 = vpack.c.b16 %v779, %v775
    %v864 = vpack.c.b16 %v780, %v776
    %v865 = vpack.c.b16 %v781, %v777
    %v866 = vpack.c.b16 %v786, %v782
    %v867 = vpack.c.b16 %v787, %v783
    %v868 = vpack.c.b16 %v788, %v784
    %v869 = vpack.c.b16 %v789, %v785
    %v870 = vpack.c.b16 %v794, %v790
    %v871 = vpack.c.b16 %v795, %v791
    %v872 = vpack.c.b16 %v796, %v792
    %v873 = vpack.c.b16 %v797, %v793
    %v874 = vpack.c.b16 %v802, %v798
    %v875 = vpack.c.b16 %v803, %v799
    %v876 = vpack.c.b16 %v804, %v800
    %v877 = vpack.c.b16 %v805, %v801
    %v878 = vpack.c.b16 %v810, %v806
    %v879 = vpack.c.b16 %v811, %v807
    %v880 = vpack.c.b16 %v812, %v808
    %v881 = vpack.c.b16 %v813, %v809
    %v882 = vpack.c.b16 %v818, %v814
    %v883 = vpack.c.b16 %v819, %v815
    %v884 = vpack.c.b16 %v820, %v816
    %v885 = vpack.c.b16 %v821, %v817
    %950 = vmatprep.subr.bf16.mxu0 %v851
    %951 = vmatpush1.bf16.msra.mxu0 %v850
    %952 = vmatprep.subr.bf16.mxu0 %v847
    %953 = vmatpush1.bf16.msra.mxu0 %v846
    %954 = vmatprep.subr.bf16.mxu0 %v843
    %955 = vmatpush1.bf16.msra.mxu0 %v842
    %956 = vmatprep.subr.bf16.mxu0 %v839
    %957 = vmatpush1.bf16.msra.mxu0 %v838
    %958 = vmatprep.subr.bf16.mxu0 %v835
    %959 = vmatpush1.bf16.msra.mxu0 %v834
    %960 = vmatprep.subr.bf16.mxu0 %v831
    %961 = vmatpush1.bf16.msra.mxu0 %v830
    %962 = vmatprep.subr.bf16.mxu0 %v827
    %963 = vmatpush1.bf16.msra.mxu0 %v826
    %964 = vmatprep.subr.bf16.mxu0 %v823
    %965 = vmatpush1.bf16.msra.mxu0 %v822
    %966 = vmatprep.subr.bf16.mxu0 %v883
    %967 = vmatpush2.bf16.msra.mxu0 %v882
    %968 = vmatprep.subr.bf16.mxu0 %v879
    %969 = vmatpush2.bf16.msra.mxu0 %v878
    %970 = vmatprep.subr.bf16.mxu0 %v875
    %971 = vmatpush2.bf16.msra.mxu0 %v874
    %972 = vmatprep.subr.bf16.mxu0 %v871
    %973 = vmatpush2.bf16.msra.mxu0 %v870
    %974 = vmatprep.subr.bf16.mxu0 %v867
    %975 = vmatpush2.bf16.msra.mxu0 %v866
    %976 = vmatprep.subr.bf16.mxu0 %v863
    %977 = vmatpush2.bf16.msra.mxu0 %v862
    %978 = vmatprep.subr.bf16.mxu0 %v859
    %979 = vmatpush2.bf16.msra.mxu0 %v858
    %980 = vmatprep.subr.bf16.mxu0 %v855
    %981 = vmatpush2.bf16.msra.mxu0 %v854
    %982 = vmatprep.mubr.bf16.mxu0 %v530
    %983 = vmatmul.mubr.bf16.gmra.mxu0 %v529
    %v984 = vpop.f32.mrf.mxu0
    %v985 = vadd.f32 %v613, %v984
    %v986 = vpop.f32.mrf.mxu0
    %v987 = vadd.f32 %v617, %v986
    %v988 = vpop.f32.mrf.mxu0
    %v989 = vadd.f32 %v613, %v988
    %v990 = vpop.f32.mrf.mxu0
    %v991 = vadd.f32 %v617, %v990
    %992 = vmatprep.mubr.bf16.mxu0 %v532
    %993 = vmatmul.mubr.bf16.gmra.mxu0 %v531
    %v994 = vpop.f32.mrf.mxu0
    %v995 = vadd.f32 %v613, %v994
    %v996 = vpop.f32.mrf.mxu0
    %v997 = vadd.f32 %v617, %v996
    %v998 = vpop.f32.mrf.mxu0
    %v999 = vadd.f32 %v613, %v998
    %v1000 = vpop.f32.mrf.mxu0
    %v1001 = vadd.f32 %v617, %v1000
    %1002 = vmatprep.mubr.bf16.mxu0 %v534
    %1003 = vmatmul.mubr.bf16.gmra.mxu0 %v533
    %v1004 = vpop.f32.mrf.mxu0
    %v1005 = vadd.f32 %v613, %v1004
    %v1006 = vpop.f32.mrf.mxu0
    %v1007 = vadd.f32 %v617, %v1006
    %v1008 = vpop.f32.mrf.mxu0
    %v1009 = vadd.f32 %v613, %v1008
    %v1010 = vpop.f32.mrf.mxu0
    %v1011 = vadd.f32 %v617, %v1010
    %1012 = vmatprep.mubr.bf16.mxu0 %v536
    %1013 = vmatmul.mubr.bf16.gmra.mxu0 %v535
    %v1014 = vpop.f32.mrf.mxu0
    %v1015 = vadd.f32 %v613, %v1014
    %v1016 = vpop.f32.mrf.mxu0
    %v1017 = vadd.f32 %v617, %v1016
    %v1018 = vpop.f32.mrf.mxu0
    %v1019 = vadd.f32 %v613, %v1018
    %v1020 = vpop.f32.mrf.mxu0
    %v1021 = vadd.f32 %v617, %v1020
    %1022 = vmatprep.mubr.bf16.mxu0 %v538
    %1023 = vmatmul.mubr.bf16.gmra.mxu0 %v537
    %v1024 = vpop.f32.mrf.mxu0
    %v1025 = vadd.f32 %v613, %v1024
    %v1026 = vpop.f32.mrf.mxu0
    %v1027 = vadd.f32 %v617, %v1026
    %v1028 = vpop.f32.mrf.mxu0
    %v1029 = vadd.f32 %v613, %v1028
    %v1030 = vpop.f32.mrf.mxu0
    %v1031 = vadd.f32 %v617, %v1030
    %1032 = vmatprep.mubr.bf16.mxu0 %v540
    %1033 = vmatmul.mubr.bf16.gmra.mxu0 %v539
    %v1034 = vpop.f32.mrf.mxu0
    %v1035 = vadd.f32 %v613, %v1034
    %v1036 = vpop.f32.mrf.mxu0
    %v1037 = vadd.f32 %v617, %v1036
    %v1038 = vpop.f32.mrf.mxu0
    %v1039 = vadd.f32 %v613, %v1038
    %v1040 = vpop.f32.mrf.mxu0
    %v1041 = vadd.f32 %v617, %v1040
    %1042 = vmatprep.mubr.bf16.mxu0 %v542
    %1043 = vmatmul.mubr.bf16.gmra.mxu0 %v541
    %v1044 = vpop.f32.mrf.mxu0
    %v1045 = vadd.f32 %v613, %v1044
    %v1046 = vpop.f32.mrf.mxu0
    %v1047 = vadd.f32 %v617, %v1046
    %v1048 = vpop.f32.mrf.mxu0
    %v1049 = vadd.f32 %v613, %v1048
    %v1050 = vpop.f32.mrf.mxu0
    %v1051 = vadd.f32 %v617, %v1050
    %1052 = vmatprep.mubr.bf16.mxu0 %v544
    %1053 = vmatmul.mubr.bf16.gmra.mxu0 %v543
    %v1054 = vpop.f32.mrf.mxu0
    %v1055 = vadd.f32 %v613, %v1054
    %v1056 = vpop.f32.mrf.mxu0
    %v1057 = vadd.f32 %v617, %v1056
    %v1058 = vpop.f32.mrf.mxu0
    %v1059 = vadd.f32 %v613, %v1058
    %v1060 = vpop.f32.mrf.mxu0
    %v1061 = vadd.f32 %v617, %v1060
    %1062 = vdwg.mxu0
    %1063 = vmatprep.subr.bf16.mxu0 %v853
    %1064 = vmatpush1.bf16.msra.mxu0 %v852
    %1065 = vmatprep.subr.bf16.mxu0 %v849
    %1066 = vmatpush1.bf16.msra.mxu0 %v848
    %1067 = vmatprep.subr.bf16.mxu0 %v845
    %1068 = vmatpush1.bf16.msra.mxu0 %v844
    %1069 = vmatprep.subr.bf16.mxu0 %v841
    %1070 = vmatpush1.bf16.msra.mxu0 %v840
    %1071 = vmatprep.subr.bf16.mxu0 %v837
    %1072 = vmatpush1.bf16.msra.mxu0 %v836
    %1073 = vmatprep.subr.bf16.mxu0 %v833
    %1074 = vmatpush1.bf16.msra.mxu0 %v832
    %1075 = vmatprep.subr.bf16.mxu0 %v829
    %1076 = vmatpush1.bf16.msra.mxu0 %v828
    %1077 = vmatprep.subr.bf16.mxu0 %v825
    %1078 = vmatpush1.bf16.msra.mxu0 %v824
    %1079 = vmatprep.subr.bf16.mxu0 %v885
    %1080 = vmatpush2.bf16.msra.mxu0 %v884
    %1081 = vmatprep.subr.bf16.mxu0 %v881
    %1082 = vmatpush2.bf16.msra.mxu0 %v880
    %1083 = vmatprep.subr.bf16.mxu0 %v877
    %1084 = vmatpush2.bf16.msra.mxu0 %v876
    %1085 = vmatprep.subr.bf16.mxu0 %v873
    %1086 = vmatpush2.bf16.msra.mxu0 %v872
    %1087 = vmatprep.subr.bf16.mxu0 %v869
    %1088 = vmatpush2.bf16.msra.mxu0 %v868
    %1089 = vmatprep.subr.bf16.mxu0 %v865
    %1090 = vmatpush2.bf16.msra.mxu0 %v864
    %1091 = vmatprep.subr.bf16.mxu0 %v861
    %1092 = vmatpush2.bf16.msra.mxu0 %v860
    %1093 = vmatprep.subr.bf16.mxu0 %v857
    %1094 = vmatpush2.bf16.msra.mxu0 %v856
    %1095 = vmatprep.mubr.bf16.mxu0 %v530
    %1096 = vmatmul.mubr.bf16.gmra.mxu0 %v529
    %v1097 = vpop.f32.mrf.mxu0
    %v1098 = vadd.f32 %v621, %v1097
    %v1099 = vpop.f32.mrf.mxu0
    %v1100 = vadd.f32 %v625, %v1099
    %v1101 = vpop.f32.mrf.mxu0
    %v1102 = vadd.f32 %v621, %v1101
    %v1103 = vpop.f32.mrf.mxu0
    %v1104 = vadd.f32 %v625, %v1103
    %1105 = vmatprep.mubr.bf16.mxu0 %v532
    %1106 = vmatmul.mubr.bf16.gmra.mxu0 %v531
    %v1107 = vpop.f32.mrf.mxu0
    %v1108 = vadd.f32 %v621, %v1107
    %v1109 = vpop.f32.mrf.mxu0
    %v1110 = vadd.f32 %v625, %v1109
    %v1111 = vpop.f32.mrf.mxu0
    %v1112 = vadd.f32 %v621, %v1111
    %v1113 = vpop.f32.mrf.mxu0
    %v1114 = vadd.f32 %v625, %v1113
    %1115 = vmatprep.mubr.bf16.mxu0 %v534
    %1116 = vmatmul.mubr.bf16.gmra.mxu0 %v533
    %v1117 = vpop.f32.mrf.mxu0
    %v1118 = vadd.f32 %v621, %v1117
    %v1119 = vpop.f32.mrf.mxu0
    %v1120 = vadd.f32 %v625, %v1119
    %v1121 = vpop.f32.mrf.mxu0
    %v1122 = vadd.f32 %v621, %v1121
    %v1123 = vpop.f32.mrf.mxu0
    %v1124 = vadd.f32 %v625, %v1123
    %1125 = vmatprep.mubr.bf16.mxu0 %v536
    %1126 = vmatmul.mubr.bf16.gmra.mxu0 %v535
    %v1127 = vpop.f32.mrf.mxu0
    %v1128 = vadd.f32 %v621, %v1127
    %v1129 = vpop.f32.mrf.mxu0
    %v1130 = vadd.f32 %v625, %v1129
    %v1131 = vpop.f32.mrf.mxu0
    %v1132 = vadd.f32 %v621, %v1131
    %v1133 = vpop.f32.mrf.mxu0
    %v1134 = vadd.f32 %v625, %v1133
    %1135 = vmatprep.mubr.bf16.mxu0 %v538
    %1136 = vmatmul.mubr.bf16.gmra.mxu0 %v537
    %v1137 = vpop.f32.mrf.mxu0
    %v1138 = vadd.f32 %v621, %v1137
    %v1139 = vpop.f32.mrf.mxu0
    %v1140 = vadd.f32 %v625, %v1139
    %v1141 = vpop.f32.mrf.mxu0
    %v1142 = vadd.f32 %v621, %v1141
    %v1143 = vpop.f32.mrf.mxu0
    %v1144 = vadd.f32 %v625, %v1143
    %1145 = vmatprep.mubr.bf16.mxu0 %v540
    %1146 = vmatmul.mubr.bf16.gmra.mxu0 %v539
    %v1147 = vpop.f32.mrf.mxu0
    %v1148 = vadd.f32 %v621, %v1147
    %v1149 = vpop.f32.mrf.mxu0
    %v1150 = vadd.f32 %v625, %v1149
    %v1151 = vpop.f32.mrf.mxu0
    %v1152 = vadd.f32 %v621, %v1151
    %v1153 = vpop.f32.mrf.mxu0
    %v1154 = vadd.f32 %v625, %v1153
    %1155 = vmatprep.mubr.bf16.mxu0 %v542
    %1156 = vmatmul.mubr.bf16.gmra.mxu0 %v541
    %v1157 = vpop.f32.mrf.mxu0
    %v1158 = vadd.f32 %v621, %v1157
    %v1159 = vpop.f32.mrf.mxu0
    %v1160 = vadd.f32 %v625, %v1159
    %v1161 = vpop.f32.mrf.mxu0
    %v1162 = vadd.f32 %v621, %v1161
    %v1163 = vpop.f32.mrf.mxu0
    %v1164 = vadd.f32 %v625, %v1163
    %1165 = vmatprep.mubr.bf16.mxu0 %v544
    %1166 = vmatmul.mubr.bf16.gmra.mxu0 %v543
    %v1167 = vpop.f32.mrf.mxu0
    %v1168 = vadd.f32 %v621, %v1167
    %v1169 = vpop.f32.mrf.mxu0
    %v1170 = vadd.f32 %v625, %v1169
    %v1171 = vpop.f32.mrf.mxu0
    %v1172 = vadd.f32 %v621, %v1171
    %v1173 = vpop.f32.mrf.mxu0
    %v1174 = vadd.f32 %v625, %v1173
    %1175 = vdwg.mxu0
    %v1176 = vmax.f32 %v985, 0.0
    %v1177 = vmax.f32 %v987, 0.0
    %v1178 = vmax.f32 %v1098, 0.0
    %v1179 = vmax.f32 %v1100, 0.0
    %v1180 = vmax.f32 %v989, 0.0
    %v1181 = vmax.f32 %v991, 0.0
    %v1182 = vmax.f32 %v1102, 0.0
    %v1183 = vmax.f32 %v1104, 0.0
    %v1184 = vmax.f32 %v995, 0.0
    %v1185 = vmax.f32 %v997, 0.0
    %v1186 = vmax.f32 %v1108, 0.0
    %v1187 = vmax.f32 %v1110, 0.0
    %v1188 = vmax.f32 %v999, 0.0
    %v1189 = vmax.f32 %v1001, 0.0
    %v1190 = vmax.f32 %v1112, 0.0
    %v1191 = vmax.f32 %v1114, 0.0
    %v1192 = vmax.f32 %v1005, 0.0
    %v1193 = vmax.f32 %v1007, 0.0
    %v1194 = vmax.f32 %v1118, 0.0
    %v1195 = vmax.f32 %v1120, 0.0
    %v1196 = vmax.f32 %v1009, 0.0
    %v1197 = vmax.f32 %v1011, 0.0
    %v1198 = vmax.f32 %v1122, 0.0
    %v1199 = vmax.f32 %v1124, 0.0
    %v1200 = vmax.f32 %v1015, 0.0
    %v1201 = vmax.f32 %v1017, 0.0
    %v1202 = vmax.f32 %v1128, 0.0
    %v1203 = vmax.f32 %v1130, 0.0
    %v1204 = vmax.f32 %v1019, 0.0
    %v1205 = vmax.f32 %v1021, 0.0
    %v1206 = vmax.f32 %v1132, 0.0
    %v1207 = vmax.f32 %v1134, 0.0
    %v1208 = vmax.f32 %v1025, 0.0
    %v1209 = vmax.f32 %v1027, 0.0
    %v1210 = vmax.f32 %v1138, 0.0
    %v1211 = vmax.f32 %v1140, 0.0
    %v1212 = vmax.f32 %v1029, 0.0
    %v1213 = vmax.f32 %v1031, 0.0
    %v1214 = vmax.f32 %v1142, 0.0
    %v1215 = vmax.f32 %v1144, 0.0
    %v1216 = vmax.f32 %v1035, 0.0
    %v1217 = vmax.f32 %v1037, 0.0
    %v1218 = vmax.f32 %v1148, 0.0
    %v1219 = vmax.f32 %v1150, 0.0
    %v1220 = vmax.f32 %v1039, 0.0
    %v1221 = vmax.f32 %v1041, 0.0
    %v1222 = vmax.f32 %v1152, 0.0
    %v1223 = vmax.f32 %v1154, 0.0
    %v1224 = vmax.f32 %v1045, 0.0
    %v1225 = vmax.f32 %v1047, 0.0
    %v1226 = vmax.f32 %v1158, 0.0
    %v1227 = vmax.f32 %v1160, 0.0
    %v1228 = vmax.f32 %v1049, 0.0
    %v1229 = vmax.f32 %v1051, 0.0
    %v1230 = vmax.f32 %v1162, 0.0
    %v1231 = vmax.f32 %v1164, 0.0
    %v1232 = vmax.f32 %v1055, 0.0
    %v1233 = vmax.f32 %v1057, 0.0
    %v1234 = vmax.f32 %v1168, 0.0
    %v1235 = vmax.f32 %v1170, 0.0
    %v1236 = vmax.f32 %v1059, 0.0
    %v1237 = vmax.f32 %v1061, 0.0
    %v1238 = vmax.f32 %v1172, 0.0
    %v1239 = vmax.f32 %v1174, 0.0
    %v1240 = vpack.c.bf16 %v1180, %v1176
    %v1241 = vpack.c.bf16 %v1181, %v1177
    %v1242 = vpack.c.bf16 %v1182, %v1178
    %v1243 = vpack.c.bf16 %v1183, %v1179
    %v1244 = vpack.c.bf16 %v1188, %v1184
    %v1245 = vpack.c.bf16 %v1189, %v1185
    %v1246 = vpack.c.bf16 %v1190, %v1186
    %v1247 = vpack.c.bf16 %v1191, %v1187
    %v1248 = vpack.c.bf16 %v1196, %v1192
    %v1249 = vpack.c.bf16 %v1197, %v1193
    %v1250 = vpack.c.bf16 %v1198, %v1194
    %v1251 = vpack.c.bf16 %v1199, %v1195
    %v1252 = vpack.c.bf16 %v1204, %v1200
    %v1253 = vpack.c.bf16 %v1205, %v1201
    %v1254 = vpack.c.bf16 %v1206, %v1202
    %v1255 = vpack.c.bf16 %v1207, %v1203
    %v1256 = vpack.c.bf16 %v1212, %v1208
    %v1257 = vpack.c.bf16 %v1213, %v1209
    %v1258 = vpack.c.bf16 %v1214, %v1210
    %v1259 = vpack.c.bf16 %v1215, %v1211
    %v1260 = vpack.c.bf16 %v1220, %v1216
    %v1261 = vpack.c.bf16 %v1221, %v1217
    %v1262 = vpack.c.bf16 %v1222, %v1218
    %v1263 = vpack.c.bf16 %v1223, %v1219
    %v1264 = vpack.c.bf16 %v1228, %v1224
    %v1265 = vpack.c.bf16 %v1229, %v1225
    %v1266 = vpack.c.bf16 %v1230, %v1226
    %v1267 = vpack.c.bf16 %v1231, %v1227
    %v1268 = vpack.c.bf16 %v1236, %v1232
    %v1269 = vpack.c.bf16 %v1237, %v1233
    %v1270 = vpack.c.bf16 %v1238, %v1234
    %v1271 = vpack.c.bf16 %v1239, %v1235
    %v1272 = vld [vmem:[#allocation4] sm:$0xf]
    %v1273 = vld [vmem:[#allocation4 + $0x4] sm:$0xf]
    %v1274 = vld [vmem:[#allocation4 + $0x8] sm:$0xf]
    %v1275 = vld [vmem:[#allocation4 + $0xc] sm:$0xf]
    %v1276 = vld [vmem:[#allocation4 + $0x10] sm:$0xf]
    %v1277 = vld [vmem:[#allocation4 + $0x14] sm:$0xf]
    %v1278 = vld [vmem:[#allocation4 + $0x18] sm:$0xf]
    %v1279 = vld [vmem:[#allocation4 + $0x1c] sm:$0xf]
    %v1280 = vld [vmem:[#allocation4 + $0x20] sm:$0xf]
    %v1281 = vld [vmem:[#allocation4 + $0x24] sm:$0xf]
    %v1282 = vld [vmem:[#allocation4 + $0x28] sm:$0xf]
    %v1283 = vld [vmem:[#allocation4 + $0x2c] sm:$0xf]
    %v1284 = vld [vmem:[#allocation4 + $0x30] sm:$0xf]
    %v1285 = vld [vmem:[#allocation4 + $0x34] sm:$0xf]
    %v1286 = vld [vmem:[#allocation4 + $0x38] sm:$0xf]
    %v1287 = vld [vmem:[#allocation4 + $0x3c] sm:$0xf]
    %v1288 = vld [vmem:[#allocation4 + $0x40] sm:$0xf]
    %v1289 = vld [vmem:[#allocation4 + $0x44] sm:$0xf]
    %v1290 = vld [vmem:[#allocation4 + $0x48] sm:$0xf]
    %v1291 = vld [vmem:[#allocation4 + $0x4c] sm:$0xf]
    %v1292 = vld [vmem:[#allocation4 + $0x50] sm:$0xf]
    %v1293 = vld [vmem:[#allocation4 + $0x54] sm:$0xf]
    %v1294 = vld [vmem:[#allocation4 + $0x58] sm:$0xf]
    %v1295 = vld [vmem:[#allocation4 + $0x5c] sm:$0xf]
    %v1296 = vld [vmem:[#allocation4 + $0x60] sm:$0xf]
    %v1297 = vld [vmem:[#allocation4 + $0x64] sm:$0xf]
    %v1298 = vld [vmem:[#allocation4 + $0x68] sm:$0xf]
    %v1299 = vld [vmem:[#allocation4 + $0x6c] sm:$0xf]
    %v1300 = vld [vmem:[#allocation4 + $0x70] sm:$0xf]
    %v1301 = vld [vmem:[#allocation4 + $0x74] sm:$0xf]
    %v1302 = vld [vmem:[#allocation4 + $0x78] sm:$0xf]
    %v1303 = vld [vmem:[#allocation4 + $0x7c] sm:$0xf]
    %v1304 = vld [vmem:[#allocation4 + $0x80] sm:$0xf]
    %v1305 = vld [vmem:[#allocation4 + $0x84] sm:$0xf]
    %v1306 = vld [vmem:[#allocation4 + $0x88] sm:$0xf]
    %v1307 = vld [vmem:[#allocation4 + $0x8c] sm:$0xf]
    %v1308 = vld [vmem:[#allocation4 + $0x90] sm:$0xf]
    %v1309 = vld [vmem:[#allocation4 + $0x94] sm:$0xf]
    %v1310 = vld [vmem:[#allocation4 + $0x98] sm:$0xf]
    %v1311 = vld [vmem:[#allocation4 + $0x9c] sm:$0xf]
    %v1312 = vld [vmem:[#allocation4 + $0xa0] sm:$0xf]
    %v1313 = vld [vmem:[#allocation4 + $0xa4] sm:$0xf]
    %v1314 = vld [vmem:[#allocation4 + $0xa8] sm:$0xf]
    %v1315 = vld [vmem:[#allocation4 + $0xac] sm:$0xf]
    %v1316 = vld [vmem:[#allocation4 + $0xb0] sm:$0xf]
    %v1317 = vld [vmem:[#allocation4 + $0xb4] sm:$0xf]
    %v1318 = vld [vmem:[#allocation4 + $0xb8] sm:$0xf]
    %v1319 = vld [vmem:[#allocation4 + $0xbc] sm:$0xf]
    %v1320 = vld [vmem:[#allocation4 + $0xc0] sm:$0xf]
    %v1321 = vld [vmem:[#allocation4 + $0xc4] sm:$0xf]
    %v1322 = vld [vmem:[#allocation4 + $0xc8] sm:$0xf]
    %v1323 = vld [vmem:[#allocation4 + $0xcc] sm:$0xf]
    %v1324 = vld [vmem:[#allocation4 + $0xd0] sm:$0xf]
    %v1325 = vld [vmem:[#allocation4 + $0xd4] sm:$0xf]
    %v1326 = vld [vmem:[#allocation4 + $0xd8] sm:$0xf]
    %v1327 = vld [vmem:[#allocation4 + $0xdc] sm:$0xf]
    %v1328 = vld [vmem:[#allocation4 + $0xe0] sm:$0xf]
    %v1329 = vld [vmem:[#allocation4 + $0xe4] sm:$0xf]
    %v1330 = vld [vmem:[#allocation4 + $0xe8] sm:$0xf]
    %v1331 = vld [vmem:[#allocation4 + $0xec] sm:$0xf]
    %v1332 = vld [vmem:[#allocation4 + $0xf0] sm:$0xf]
    %v1333 = vld [vmem:[#allocation4 + $0xf4] sm:$0xf]
    %v1334 = vld [vmem:[#allocation4 + $0xf8] sm:$0xf]
    %v1335 = vld [vmem:[#allocation4 + $0xfc] sm:$0xf]
    %v1337 = vlaneseq
    %v1338 = vshrl.u32 %v1337, 7
    %v1339 = vsub.s32 0, %v1338
    %v1340 = vrot.slane %v58, %v1339
    %v1406 = vunpack.c.l.b16 %v1272
    %v1407 = vunpack.c.l.b16 %v1273
    %v1408 = vunpack.c.l.b16 %v1274
    %v1409 = vunpack.c.l.b16 %v1275
    %v1410 = vunpack.c.l.b16 %v1276
    %v1411 = vunpack.c.l.b16 %v1277
    %v1412 = vunpack.c.l.b16 %v1278
    %v1413 = vunpack.c.l.b16 %v1279
    %v1414 = vunpack.c.l.b16 %v1280
    %v1415 = vunpack.c.l.b16 %v1281
    %v1416 = vunpack.c.l.b16 %v1282
    %v1417 = vunpack.c.l.b16 %v1283
    %v1418 = vunpack.c.l.b16 %v1284
    %v1419 = vunpack.c.l.b16 %v1285
    %v1420 = vunpack.c.l.b16 %v1286
    %v1421 = vunpack.c.l.b16 %v1287
    %v1422 = vunpack.c.l.b16 %v1288
    %v1423 = vunpack.c.l.b16 %v1289
    %v1424 = vunpack.c.l.b16 %v1290
    %v1425 = vunpack.c.l.b16 %v1291
    %v1426 = vunpack.c.l.b16 %v1292
    %v1427 = vunpack.c.l.b16 %v1293
    %v1428 = vunpack.c.l.b16 %v1294
    %v1429 = vunpack.c.l.b16 %v1295
    %v1430 = vunpack.c.l.b16 %v1296
    %v1431 = vunpack.c.l.b16 %v1297
    %v1432 = vunpack.c.l.b16 %v1298
    %v1433 = vunpack.c.l.b16 %v1299
    %v1434 = vunpack.c.l.b16 %v1300
    %v1435 = vunpack.c.l.b16 %v1301
    %v1436 = vunpack.c.l.b16 %v1302
    %v1437 = vunpack.c.l.b16 %v1303
    %v1438 = vunpack.c.l.b16 %v1304
    %v1439 = vunpack.c.l.b16 %v1305
    %v1440 = vunpack.c.l.b16 %v1306
    %v1441 = vunpack.c.l.b16 %v1307
    %v1442 = vunpack.c.l.b16 %v1308
    %v1443 = vunpack.c.l.b16 %v1309
    %v1444 = vunpack.c.l.b16 %v1310
    %v1445 = vunpack.c.l.b16 %v1311
    %v1446 = vunpack.c.l.b16 %v1312
    %v1447 = vunpack.c.l.b16 %v1313
    %v1448 = vunpack.c.l.b16 %v1314
    %v1449 = vunpack.c.l.b16 %v1315
    %v1450 = vunpack.c.l.b16 %v1316
    %v1451 = vunpack.c.l.b16 %v1317
    %v1452 = vunpack.c.l.b16 %v1318
    %v1453 = vunpack.c.l.b16 %v1319
    %v1454 = vunpack.c.l.b16 %v1320
    %v1455 = vunpack.c.l.b16 %v1321
    %v1456 = vunpack.c.l.b16 %v1322
    %v1457 = vunpack.c.l.b16 %v1323
    %v1458 = vunpack.c.l.b16 %v1324
    %v1459 = vunpack.c.l.b16 %v1325
    %v1460 = vunpack.c.l.b16 %v1326
    %v1461 = vunpack.c.l.b16 %v1327
    %v1462 = vunpack.c.l.b16 %v1328
    %v1463 = vunpack.c.l.b16 %v1329
    %v1464 = vunpack.c.l.b16 %v1330
    %v1465 = vunpack.c.l.b16 %v1331
    %v1466 = vunpack.c.l.b16 %v1332
    %v1467 = vunpack.c.l.b16 %v1333
    %v1468 = vunpack.c.l.b16 %v1334
    %v1469 = vunpack.c.l.b16 %v1335
    %v1470 = vpack.c.b16 %v1407, %v1406
    %v1471 = vpack.c.b16 %v1409, %v1408
    %v1472 = vpack.c.b16 %v1411, %v1410
    %v1473 = vpack.c.b16 %v1413, %v1412
    %v1474 = vpack.c.b16 %v1415, %v1414
    %v1475 = vpack.c.b16 %v1417, %v1416
    %v1476 = vpack.c.b16 %v1419, %v1418
    %v1477 = vpack.c.b16 %v1421, %v1420
    %v1478 = vpack.c.b16 %v1423, %v1422
    %v1479 = vpack.c.b16 %v1425, %v1424
    %v1480 = vpack.c.b16 %v1427, %v1426
    %v1481 = vpack.c.b16 %v1429, %v1428
    %v1482 = vpack.c.b16 %v1431, %v1430
    %v1483 = vpack.c.b16 %v1433, %v1432
    %v1484 = vpack.c.b16 %v1435, %v1434
    %v1485 = vpack.c.b16 %v1437, %v1436
    %v1486 = vpack.c.b16 %v1439, %v1438
    %v1487 = vpack.c.b16 %v1441, %v1440
    %v1488 = vpack.c.b16 %v1443, %v1442
    %v1489 = vpack.c.b16 %v1445, %v1444
    %v1490 = vpack.c.b16 %v1447, %v1446
    %v1491 = vpack.c.b16 %v1449, %v1448
    %v1492 = vpack.c.b16 %v1451, %v1450
    %v1493 = vpack.c.b16 %v1453, %v1452
    %v1494 = vpack.c.b16 %v1455, %v1454
    %v1495 = vpack.c.b16 %v1457, %v1456
    %v1496 = vpack.c.b16 %v1459, %v1458
    %v1497 = vpack.c.b16 %v1461, %v1460
    %v1498 = vpack.c.b16 %v1463, %v1462
    %v1499 = vpack.c.b16 %v1465, %v1464
    %v1500 = vpack.c.b16 %v1467, %v1466
    %v1501 = vpack.c.b16 %v1469, %v1468
    %1534 = vmatprep.subr.bf16.mxu0 0
    %1535 = vmatpush1.bf16.msra.mxu0 %v1477
    %1536 = vmatprep.subr.bf16.mxu0 0
    %1537 = vmatpush1.bf16.msra.mxu0 %v1476
    %1538 = vmatprep.subr.bf16.mxu0 0
    %1539 = vmatpush1.bf16.msra.mxu0 %v1475
    %1540 = vmatprep.subr.bf16.mxu0 0
    %1541 = vmatpush1.bf16.msra.mxu0 %v1474
    %1542 = vmatprep.subr.bf16.mxu0 0
    %1543 = vmatpush1.bf16.msra.mxu0 %v1473
    %1544 = vmatprep.subr.bf16.mxu0 0
    %1545 = vmatpush1.bf16.msra.mxu0 %v1472
    %1546 = vmatprep.subr.bf16.mxu0 0
    %1547 = vmatpush1.bf16.msra.mxu0 %v1471
    %1548 = vmatprep.subr.bf16.mxu0 0
    %1549 = vmatpush1.bf16.msra.mxu0 %v1470
    %1550 = vmatprep.subr.bf16.mxu0 0
    %1551 = vmatpush2.bf16.msra.mxu0 %v1485
    %1552 = vmatprep.subr.bf16.mxu0 0
    %1553 = vmatpush2.bf16.msra.mxu0 %v1484
    %1554 = vmatprep.subr.bf16.mxu0 0
    %1555 = vmatpush2.bf16.msra.mxu0 %v1483
    %1556 = vmatprep.subr.bf16.mxu0 0
    %1557 = vmatpush2.bf16.msra.mxu0 %v1482
    %1558 = vmatprep.subr.bf16.mxu0 0
    %1559 = vmatpush2.bf16.msra.mxu0 %v1481
    %1560 = vmatprep.subr.bf16.mxu0 0
    %1561 = vmatpush2.bf16.msra.mxu0 %v1480
    %1562 = vmatprep.subr.bf16.mxu0 0
    %1563 = vmatpush2.bf16.msra.mxu0 %v1479
    %1564 = vmatprep.subr.bf16.mxu0 0
    %1565 = vmatpush2.bf16.msra.mxu0 %v1478
    %1566 = vmatprep.mubr.bf16.mxu0 %v1241
    %1567 = vmatmul.mubr.bf16.gmra.mxu0 %v1240
    %v1568 = vpop.f32.mrf.mxu0
    %v1569 = vadd.f32 %v1340, %v1568
    %v1570 = vpop.f32.mrf.mxu0
    %v1571 = vpop.f32.mrf.mxu0
    %v1572 = vadd.f32 %v1340, %v1571
    %v1573 = vpop.f32.mrf.mxu0
    %1574 = vmatprep.mubr.bf16.mxu0 %v1245
    %1575 = vmatmul.mubr.bf16.gmra.mxu0 %v1244
    %v1576 = vpop.f32.mrf.mxu0
    %v1577 = vadd.f32 %v1340, %v1576
    %v1578 = vpop.f32.mrf.mxu0
    %v1579 = vpop.f32.mrf.mxu0
    %v1580 = vadd.f32 %v1340, %v1579
    %v1581 = vpop.f32.mrf.mxu0
    %1582 = vmatprep.mubr.bf16.mxu0 %v1249
    %1583 = vmatmul.mubr.bf16.gmra.mxu0 %v1248
    %v1584 = vpop.f32.mrf.mxu0
    %v1585 = vadd.f32 %v1340, %v1584
    %v1586 = vpop.f32.mrf.mxu0
    %v1587 = vpop.f32.mrf.mxu0
    %v1588 = vadd.f32 %v1340, %v1587
    %v1589 = vpop.f32.mrf.mxu0
    %1590 = vmatprep.mubr.bf16.mxu0 %v1253
    %1591 = vmatmul.mubr.bf16.gmra.mxu0 %v1252
    %v1592 = vpop.f32.mrf.mxu0
    %v1593 = vadd.f32 %v1340, %v1592
    %v1594 = vpop.f32.mrf.mxu0
    %v1595 = vpop.f32.mrf.mxu0
    %v1596 = vadd.f32 %v1340, %v1595
    %v1597 = vpop.f32.mrf.mxu0
    %1598 = vmatprep.mubr.bf16.mxu0 %v1257
    %1599 = vmatmul.mubr.bf16.gmra.mxu0 %v1256
    %v1600 = vpop.f32.mrf.mxu0
    %v1601 = vadd.f32 %v1340, %v1600
    %v1602 = vpop.f32.mrf.mxu0
    %v1603 = vpop.f32.mrf.mxu0
    %v1604 = vadd.f32 %v1340, %v1603
    %v1605 = vpop.f32.mrf.mxu0
    %1606 = vmatprep.mubr.bf16.mxu0 %v1261
    %1607 = vmatmul.mubr.bf16.gmra.mxu0 %v1260
    %v1608 = vpop.f32.mrf.mxu0
    %v1609 = vadd.f32 %v1340, %v1608
    %v1610 = vpop.f32.mrf.mxu0
    %v1611 = vpop.f32.mrf.mxu0
    %v1612 = vadd.f32 %v1340, %v1611
    %v1613 = vpop.f32.mrf.mxu0
    %1614 = vmatprep.mubr.bf16.mxu0 %v1265
    %1615 = vmatmul.mubr.bf16.gmra.mxu0 %v1264
    %v1616 = vpop.f32.mrf.mxu0
    %v1617 = vadd.f32 %v1340, %v1616
    %v1618 = vpop.f32.mrf.mxu0
    %v1619 = vpop.f32.mrf.mxu0
    %v1620 = vadd.f32 %v1340, %v1619
    %v1621 = vpop.f32.mrf.mxu0
    %1622 = vmatprep.mubr.bf16.mxu0 %v1269
    %1623 = vmatmul.mubr.bf16.gmra.mxu0 %v1268
    %v1624 = vpop.f32.mrf.mxu0
    %v1625 = vadd.f32 %v1340, %v1624
    %v1626 = vpop.f32.mrf.mxu0
    %v1627 = vpop.f32.mrf.mxu0
    %v1628 = vadd.f32 %v1340, %v1627
    %v1629 = vpop.f32.mrf.mxu0
    %1630 = vdwg.mxu0
    %1631 = vmatprep.subr.bf16.mxu0 0
    %1632 = vmatpush1.bf16.msra.mxu0 %v1493
    %1633 = vmatprep.subr.bf16.mxu0 0
    %1634 = vmatpush1.bf16.msra.mxu0 %v1492
    %1635 = vmatprep.subr.bf16.mxu0 0
    %1636 = vmatpush1.bf16.msra.mxu0 %v1491
    %1637 = vmatprep.subr.bf16.mxu0 0
    %1638 = vmatpush1.bf16.msra.mxu0 %v1490
    %1639 = vmatprep.subr.bf16.mxu0 0
    %1640 = vmatpush1.bf16.msra.mxu0 %v1489
    %1641 = vmatprep.subr.bf16.mxu0 0
    %1642 = vmatpush1.bf16.msra.mxu0 %v1488
    %1643 = vmatprep.subr.bf16.mxu0 0
    %1644 = vmatpush1.bf16.msra.mxu0 %v1487
    %1645 = vmatprep.subr.bf16.mxu0 0
    %1646 = vmatpush1.bf16.msra.mxu0 %v1486
    %1647 = vmatprep.subr.bf16.mxu0 0
    %1648 = vmatpush2.bf16.msra.mxu0 %v1501
    %1649 = vmatprep.subr.bf16.mxu0 0
    %1650 = vmatpush2.bf16.msra.mxu0 %v1500
    %1651 = vmatprep.subr.bf16.mxu0 0
    %1652 = vmatpush2.bf16.msra.mxu0 %v1499
    %1653 = vmatprep.subr.bf16.mxu0 0
    %1654 = vmatpush2.bf16.msra.mxu0 %v1498
    %1655 = vmatprep.subr.bf16.mxu0 0
    %1656 = vmatpush2.bf16.msra.mxu0 %v1497
    %1657 = vmatprep.subr.bf16.mxu0 0
    %1658 = vmatpush2.bf16.msra.mxu0 %v1496
    %1659 = vmatprep.subr.bf16.mxu0 0
    %1660 = vmatpush2.bf16.msra.mxu0 %v1495
    %1661 = vmatprep.subr.bf16.mxu0 0
    %1662 = vmatpush2.bf16.msra.mxu0 %v1494
    %1663 = vmatprep.mubr.bf16.mxu0 %v1243
    %1664 = vmatmul.mubr.bf16.gmra.mxu0 %v1242
    %v1665 = vpop.f32.mrf.mxu0
    %v1666 = vadd.f32 %v1569, %v1665
    %v1667 = vpop.f32.mrf.mxu0
    %v1668 = vpop.f32.mrf.mxu0
    %v1669 = vadd.f32 %v1572, %v1668
    %v1670 = vpop.f32.mrf.mxu0
    %1671 = vmatprep.mubr.bf16.mxu0 %v1247
    %1672 = vmatmul.mubr.bf16.gmra.mxu0 %v1246
    %v1673 = vpop.f32.mrf.mxu0
    %v1674 = vadd.f32 %v1577, %v1673
    %v1675 = vpop.f32.mrf.mxu0
    %v1676 = vpop.f32.mrf.mxu0
    %v1677 = vadd.f32 %v1580, %v1676
    %v1678 = vpop.f32.mrf.mxu0
    %1679 = vmatprep.mubr.bf16.mxu0 %v1251
    %1680 = vmatmul.mubr.bf16.gmra.mxu0 %v1250
    %v1681 = vpop.f32.mrf.mxu0
    %v1682 = vadd.f32 %v1585, %v1681
    %v1683 = vpop.f32.mrf.mxu0
    %v1684 = vpop.f32.mrf.mxu0
    %v1685 = vadd.f32 %v1588, %v1684
    %v1686 = vpop.f32.mrf.mxu0
    %1687 = vmatprep.mubr.bf16.mxu0 %v1255
    %1688 = vmatmul.mubr.bf16.gmra.mxu0 %v1254
    %v1689 = vpop.f32.mrf.mxu0
    %v1690 = vadd.f32 %v1593, %v1689
    %v1691 = vpop.f32.mrf.mxu0
    %v1692 = vpop.f32.mrf.mxu0
    %v1693 = vadd.f32 %v1596, %v1692
    %v1694 = vpop.f32.mrf.mxu0
    %1695 = vmatprep.mubr.bf16.mxu0 %v1259
    %1696 = vmatmul.mubr.bf16.gmra.mxu0 %v1258
    %v1697 = vpop.f32.mrf.mxu0
    %v1698 = vadd.f32 %v1601, %v1697
    %v1699 = vpop.f32.mrf.mxu0
    %v1700 = vpop.f32.mrf.mxu0
    %v1701 = vadd.f32 %v1604, %v1700
    %v1702 = vpop.f32.mrf.mxu0
    %1703 = vmatprep.mubr.bf16.mxu0 %v1263
    %1704 = vmatmul.mubr.bf16.gmra.mxu0 %v1262
    %v1705 = vpop.f32.mrf.mxu0
    %v1706 = vadd.f32 %v1609, %v1705
    %v1707 = vpop.f32.mrf.mxu0
    %v1708 = vpop.f32.mrf.mxu0
    %v1709 = vadd.f32 %v1612, %v1708
    %v1710 = vpop.f32.mrf.mxu0
    %1711 = vmatprep.mubr.bf16.mxu0 %v1267
    %1712 = vmatmul.mubr.bf16.gmra.mxu0 %v1266
    %v1713 = vpop.f32.mrf.mxu0
    %v1714 = vadd.f32 %v1617, %v1713
    %v1715 = vpop.f32.mrf.mxu0
    %v1716 = vpop.f32.mrf.mxu0
    %v1717 = vadd.f32 %v1620, %v1716
    %v1718 = vpop.f32.mrf.mxu0
    %1719 = vmatprep.mubr.bf16.mxu0 %v1271
    %1720 = vmatmul.mubr.bf16.gmra.mxu0 %v1270
    %v1721 = vpop.f32.mrf.mxu0
    %v1722 = vadd.f32 %v1625, %v1721
    %v1723 = vpop.f32.mrf.mxu0
    %v1724 = vpop.f32.mrf.mxu0
    %v1725 = vadd.f32 %v1628, %v1724
    %v1726 = vpop.f32.mrf.mxu0
    %1727 = vdwg.mxu0
    %v1728 = vmax.f32 %v1666, 0.0
    %v1729 = vmax.f32 %v1669, 0.0
    %v1730 = vmax.f32 %v1674, 0.0
    %v1731 = vmax.f32 %v1677, 0.0
    %v1732 = vmax.f32 %v1682, 0.0
    %v1733 = vmax.f32 %v1685, 0.0
    %v1734 = vmax.f32 %v1690, 0.0
    %v1735 = vmax.f32 %v1693, 0.0
    %v1736 = vmax.f32 %v1698, 0.0
    %v1737 = vmax.f32 %v1701, 0.0
    %v1738 = vmax.f32 %v1706, 0.0
    %v1739 = vmax.f32 %v1709, 0.0
    %v1740 = vmax.f32 %v1714, 0.0
    %v1741 = vmax.f32 %v1717, 0.0
    %v1742 = vmax.f32 %v1722, 0.0
    %v1743 = vmax.f32 %v1725, 0.0
    %v1744 = vpack.c.bf16 %v1729, %v1728
    %v1745 = vpack.c.bf16 %v1731, %v1730
    %v1746 = vpack.c.bf16 %v1733, %v1732
    %v1747 = vpack.c.bf16 %v1735, %v1734
    %v1748 = vpack.c.bf16 %v1737, %v1736
    %v1749 = vpack.c.bf16 %v1739, %v1738
    %v1750 = vpack.c.bf16 %v1741, %v1740
    %v1751 = vpack.c.bf16 %v1743, %v1742
    %v1752 = vld [vmem:[%s5] sm:$0xf]
    %v1753 = vld [vmem:[%s5 + $0x4] sm:$0xf]
    %v1754 = vld [vmem:[%s5 + $0x8] sm:$0xf]
    %v1755 = vld [vmem:[%s5 + $0xc] sm:$0xf]
    %v1756 = vld [vmem:[%s5 + $0x10] sm:$0xf]
    %v1757 = vld [vmem:[%s5 + $0x14] sm:$0xf]
    %v1758 = vld [vmem:[%s5 + $0x18] sm:$0xf]
    %v1759 = vld [vmem:[%s5 + $0x1c] sm:$0xf]
    %v1760 = vld [vmem:[%s5 + $0x20] sm:$0xf]
    %v1761 = vld [vmem:[%s5 + $0x24] sm:$0xf]
    %v1762 = vld [vmem:[%s5 + $0x28] sm:$0xf]
    %v1763 = vld [vmem:[%s5 + $0x2c] sm:$0xf]
    %v1764 = vld [vmem:[%s5 + $0x30] sm:$0xf]
    %v1765 = vld [vmem:[%s5 + $0x34] sm:$0xf]
    %v1766 = vld [vmem:[%s5 + $0x38] sm:$0xf]
    %v1767 = vld [vmem:[%s5 + $0x3c] sm:$0xf]
    %v1769 = vlaneseq
    %v1770 = vshrl.u32 %v1769, 7
    %v1771 = vsub.s32 0, %v1770
    %v1772 = vrot.slane %v59, %v1771
    %v1790 = vunpack.c.l.b16 %v1752
    %v1791 = vunpack.c.l.b16 %v1753
    %v1792 = vunpack.c.l.b16 %v1754
    %v1793 = vunpack.c.l.b16 %v1755
    %v1794 = vunpack.c.l.b16 %v1756
    %v1795 = vunpack.c.l.b16 %v1757
    %v1796 = vunpack.c.l.b16 %v1758
    %v1797 = vunpack.c.l.b16 %v1759
    %v1798 = vunpack.c.l.b16 %v1760
    %v1799 = vunpack.c.l.b16 %v1761
    %v1800 = vunpack.c.l.b16 %v1762
    %v1801 = vunpack.c.l.b16 %v1763
    %v1802 = vunpack.c.l.b16 %v1764
    %v1803 = vunpack.c.l.b16 %v1765
    %v1804 = vunpack.c.l.b16 %v1766
    %v1805 = vunpack.c.l.b16 %v1767
    %v1806 = vpack.c.b16 %v1791, %v1790
    %v1807 = vpack.c.b16 %v1793, %v1792
    %v1808 = vpack.c.b16 %v1795, %v1794
    %v1809 = vpack.c.b16 %v1797, %v1796
    %v1810 = vpack.c.b16 %v1799, %v1798
    %v1811 = vpack.c.b16 %v1801, %v1800
    %v1812 = vpack.c.b16 %v1803, %v1802
    %v1813 = vpack.c.b16 %v1805, %v1804
    %1822 = vmatprep.subr.bf16.mxu0 0
    %1823 = vmatpush1.bf16.msra.mxu0 %v1813
    %1824 = vmatprep.subr.bf16.mxu0 0
    %1825 = vmatpush1.bf16.msra.mxu0 %v1812
    %1826 = vmatprep.subr.bf16.mxu0 0
    %1827 = vmatpush1.bf16.msra.mxu0 %v1811
    %1828 = vmatprep.subr.bf16.mxu0 0
    %1829 = vmatpush1.bf16.msra.mxu0 %v1810
    %1830 = vmatprep.subr.bf16.mxu0 0
    %1831 = vmatpush1.bf16.msra.mxu0 %v1809
    %1832 = vmatprep.subr.bf16.mxu0 0
    %1833 = vmatpush1.bf16.msra.mxu0 %v1808
    %1834 = vmatprep.subr.bf16.mxu0 0
    %1835 = vmatpush1.bf16.msra.mxu0 %v1807
    %1836 = vmatprep.subr.bf16.mxu0 0
    %1837 = vmatpush1.bf16.msra.mxu0 %v1806
    %1838 = vmatprep.subr.bf16.mxu0 0
    %1839 = vmatpush2.bf16.msra.mxu0 0
    %1840 = vmatprep.subr.bf16.mxu0 0
    %1841 = vmatpush2.bf16.msra.mxu0 0
    %1842 = vmatprep.subr.bf16.mxu0 0
    %1843 = vmatpush2.bf16.msra.mxu0 0
    %1844 = vmatprep.subr.bf16.mxu0 0
    %1845 = vmatpush2.bf16.msra.mxu0 0
    %1846 = vmatprep.subr.bf16.mxu0 0
    %1847 = vmatpush2.bf16.msra.mxu0 0
    %1848 = vmatprep.subr.bf16.mxu0 0
    %1849 = vmatpush2.bf16.msra.mxu0 0
    %1850 = vmatprep.subr.bf16.mxu0 0
    %1851 = vmatpush2.bf16.msra.mxu0 0
    %1852 = vmatprep.subr.bf16.mxu0 0
    %1853 = vmatpush2.bf16.msra.mxu0 0
    %1854 = vmatprep.mubr.bf16.mxu0 0
    %1855 = vmatmul.mubr.bf16.gmra.mxu0 %v1744
    %v1856 = vpop.f32.mrf.mxu0
    %v1857 = vadd.f32 %v1772, %v1856
    %v1858 = vpop.f32.mrf.mxu0
    %v1859 = vpop.f32.mrf.mxu0
    %v1860 = vadd.f32 %v1772, %v1859
    %v1861 = vpop.f32.mrf.mxu0
    %1862 = vmatprep.mubr.bf16.mxu0 0
    %1863 = vmatmul.mubr.bf16.gmra.mxu0 %v1745
    %v1864 = vpop.f32.mrf.mxu0
    %v1865 = vadd.f32 %v1772, %v1864
    %v1866 = vpop.f32.mrf.mxu0
    %v1867 = vpop.f32.mrf.mxu0
    %v1868 = vadd.f32 %v1772, %v1867
    %v1869 = vpop.f32.mrf.mxu0
    %1870 = vmatprep.mubr.bf16.mxu0 0
    %1871 = vmatmul.mubr.bf16.gmra.mxu0 %v1746
    %v1872 = vpop.f32.mrf.mxu0
    %v1873 = vadd.f32 %v1772, %v1872
    %v1874 = vpop.f32.mrf.mxu0
    %v1875 = vpop.f32.mrf.mxu0
    %v1876 = vadd.f32 %v1772, %v1875
    %v1877 = vpop.f32.mrf.mxu0
    %1878 = vmatprep.mubr.bf16.mxu0 0
    %1879 = vmatmul.mubr.bf16.gmra.mxu0 %v1747
    %v1880 = vpop.f32.mrf.mxu0
    %v1881 = vadd.f32 %v1772, %v1880
    %v1882 = vpop.f32.mrf.mxu0
    %v1883 = vpop.f32.mrf.mxu0
    %v1884 = vadd.f32 %v1772, %v1883
    %v1885 = vpop.f32.mrf.mxu0
    %1886 = vmatprep.mubr.bf16.mxu0 0
    %1887 = vmatmul.mubr.bf16.gmra.mxu0 %v1748
    %v1888 = vpop.f32.mrf.mxu0
    %v1889 = vadd.f32 %v1772, %v1888
    %v1890 = vpop.f32.mrf.mxu0
    %v1891 = vpop.f32.mrf.mxu0
    %v1892 = vadd.f32 %v1772, %v1891
    %v1893 = vpop.f32.mrf.mxu0
    %1894 = vmatprep.mubr.bf16.mxu0 0
    %1895 = vmatmul.mubr.bf16.gmra.mxu0 %v1749
    %v1896 = vpop.f32.mrf.mxu0
    %v1897 = vadd.f32 %v1772, %v1896
    %v1898 = vpop.f32.mrf.mxu0
    %v1899 = vpop.f32.mrf.mxu0
    %v1900 = vadd.f32 %v1772, %v1899
    %v1901 = vpop.f32.mrf.mxu0
    %1902 = vmatprep.mubr.bf16.mxu0 0
    %1903 = vmatmul.mubr.bf16.gmra.mxu0 %v1750
    %v1904 = vpop.f32.mrf.mxu0
    %v1905 = vadd.f32 %v1772, %v1904
    %v1906 = vpop.f32.mrf.mxu0
    %v1907 = vpop.f32.mrf.mxu0
    %v1908 = vadd.f32 %v1772, %v1907
    %v1909 = vpop.f32.mrf.mxu0
    %1910 = vmatprep.mubr.bf16.mxu0 0
    %1911 = vmatmul.mubr.bf16.gmra.mxu0 %v1751
    %v1912 = vpop.f32.mrf.mxu0
    %v1913 = vadd.f32 %v1772, %v1912
    %v1914 = vpop.f32.mrf.mxu0
    %v1915 = vpop.f32.mrf.mxu0
    %v1916 = vadd.f32 %v1772, %v1915
    %v1917 = vpop.f32.mrf.mxu0
    %1918 = vdwg.mxu0
    %v1919 = vmax.f32 %v1857, 0.0
    %v1920 = vmax.f32 %v1860, 0.0
    %v1921 = vmax.f32 %v1865, 0.0
    %v1922 = vmax.f32 %v1868, 0.0
    %v1923 = vmax.f32 %v1873, 0.0
    %v1924 = vmax.f32 %v1876, 0.0
    %v1925 = vmax.f32 %v1881, 0.0
    %v1926 = vmax.f32 %v1884, 0.0
    %v1927 = vmax.f32 %v1889, 0.0
    %v1928 = vmax.f32 %v1892, 0.0
    %v1929 = vmax.f32 %v1897, 0.0
    %v1930 = vmax.f32 %v1900, 0.0
    %v1931 = vmax.f32 %v1905, 0.0
    %v1932 = vmax.f32 %v1908, 0.0
    %v1933 = vmax.f32 %v1913, 0.0
    %v1934 = vmax.f32 %v1916, 0.0
    %v1936 = vlaneseq
    %v1937 = vshrl.u32 %v1936, 7
    %v1938 = vsub.s32 0, %v1937
    %v1939 = vrot.slane %v60, %v1938
    %vm1940 = vcmask 261120
    %v1941 = vsel %vm1940, %v1939, 0
    %v1944 = vsel %vm1940, %v1919, 0
    %v1947 = vsel %vm1940, %v1920, 0
    %v1950 = vsel %vm1940, %v1921, 0
    %v1953 = vsel %vm1940, %v1922, 0
    %v1956 = vsel %vm1940, %v1923, 0
    %v1959 = vsel %vm1940, %v1924, 0
    %v1962 = vsel %vm1940, %v1925, 0
    %v1965 = vsel %vm1940, %v1926, 0
    %v1968 = vsel %vm1940, %v1927, 0
    %v1971 = vsel %vm1940, %v1928, 0
    %v1974 = vsel %vm1940, %v1929, 0
    %v1977 = vsel %vm1940, %v1930, 0
    %v1980 = vsel %vm1940, %v1931, 0
    %v1983 = vsel %vm1940, %v1932, 0
    %v1986 = vsel %vm1940, %v1933, 0
    %v1989 = vsel %vm1940, %v1934, 0
    %1991 = vmatprep.subr.mxu0 0.0
    %1992 = vmatpush1.xpose.msra.mxu0 %v1989
    %1993 = vmatprep.subr.mxu0 0.0
    %1994 = vmatpush1.xpose.msra.mxu0 %v1986
    %1995 = vmatprep.subr.mxu0 0.0
    %1996 = vmatpush1.xpose.msra.mxu0 %v1983
    %1997 = vmatprep.subr.mxu0 0.0
    %1998 = vmatpush1.xpose.msra.mxu0 %v1980
    %1999 = vmatprep.subr.mxu0 0.0
    %2000 = vmatpush1.xpose.msra.mxu0 %v1977
    %2001 = vmatprep.subr.mxu0 0.0
    %2002 = vmatpush1.xpose.msra.mxu0 %v1974
    %2003 = vmatprep.subr.mxu0 0.0
    %2004 = vmatpush1.xpose.msra.mxu0 %v1971
    %2005 = vmatprep.subr.mxu0 0.0
    %2006 = vmatpush1.xpose.msra.mxu0 %v1968
    %2007 = vmatprep.subr.mxu0 0.0
    %2008 = vmatpush1.xpose.msra.mxu0 %v1965
    %2009 = vmatprep.subr.mxu0 0.0
    %2010 = vmatpush1.xpose.msra.mxu0 %v1962
    %2011 = vmatprep.subr.mxu0 0.0
    %2012 = vmatpush1.xpose.msra.mxu0 %v1959
    %2013 = vmatprep.subr.mxu0 0.0
    %2014 = vmatpush1.xpose.msra.mxu0 %v1956
    %2015 = vmatprep.subr.mxu0 0.0
    %2016 = vmatpush1.xpose.msra.mxu0 %v1953
    %2017 = vmatprep.subr.mxu0 0.0
    %2018 = vmatpush1.xpose.msra.mxu0 %v1950
    %2019 = vmatprep.subr.mxu0 0.0
    %2020 = vmatpush1.xpose.msra.mxu0 %v1947
    %2021 = vmatprep.subr.mxu0 0.0
    %2022 = vmatpush1.xpose.msra.mxu0 %v1944
    %2023 = vmatprep.subr.mxu0 0.0
    %2024 = vmatpush2.xpose.msra.mxu0 0.0
    %2025 = vmatprep.subr.mxu0 0.0
    %2026 = vmatpush2.xpose.msra.mxu0 0.0
    %2027 = vmatprep.subr.mxu0 0.0
    %2028 = vmatpush2.xpose.msra.mxu0 0.0
    %2029 = vmatprep.subr.mxu0 0.0
    %2030 = vmatpush2.xpose.msra.mxu0 0.0
    %2031 = vmatprep.subr.mxu0 0.0
    %2032 = vmatpush2.xpose.msra.mxu0 0.0
    %2033 = vmatprep.subr.mxu0 0.0
    %2034 = vmatpush2.xpose.msra.mxu0 0.0
    %2035 = vmatprep.subr.mxu0 0.0
    %2036 = vmatpush2.xpose.msra.mxu0 0.0
    %2037 = vmatprep.subr.mxu0 0.0
    %2038 = vmatpush2.xpose.msra.mxu0 0.0
    %2039 = vmatprep.subr.mxu0 0.0
    %2040 = vmatpush2.xpose.msra.mxu0 0.0
    %2041 = vmatprep.subr.mxu0 0.0
    %2042 = vmatpush2.xpose.msra.mxu0 0.0
    %2043 = vmatprep.subr.mxu0 0.0
    %2044 = vmatpush2.xpose.msra.mxu0 0.0
    %2045 = vmatprep.subr.mxu0 0.0
    %2046 = vmatpush2.xpose.msra.mxu0 0.0
    %2047 = vmatprep.subr.mxu0 0.0
    %2048 = vmatpush2.xpose.msra.mxu0 0.0
    %2049 = vmatprep.subr.mxu0 0.0
    %2050 = vmatpush2.xpose.msra.mxu0 0.0
    %2051 = vmatprep.subr.mxu0 0.0
    %2052 = vmatpush2.xpose.msra.mxu0 0.0
    %2053 = vmatprep.subr.mxu0 0.0
    %2054 = vmatpush2.xpose.msra.mxu0 0.0
    %2055 = vmatprep.mubr.f32.mxu0 0.0
    %2056 = vmatmul.mubr.f32.gmra.mxu0 %v1941
    %v2057 = vpop.f32.mrf.mxu0
    %v2058 = vadd.f32 0.0, %v2057
    %v2059 = vpop.f32.mrf.mxu0
    %2060 = vdwg.mxu0
    %2062 = vset.pattern.permute.xlu0 0
    %2063 = vperm.xlu0 %2062, %v61
    %v2064 = vpop.permute.xlu0 %2063
    %v2066 = vlaneseq
    %v2067 = vshrl.u32 %v2066, 7
    %v2068 = vsub.s32 0, %v2067
    %v2069 = vrot.slane %v2064, %v2068
    %v2070 = vadd.f32 %v2058, %v2069
    %2071 = vst [vmem:[%s7] sm:$0x1] %v2070
    // Predicated region
    $region38: #{mlp_forward.1} parent=1 // pred_check
      _
    $region39: #{mlp_forward.1} parent=1 // pred_check_branch
      %2073 = sbr.rel (0) target = $region41
    $region40: #{mlp_forward.1} parent=1 // pred_region
      _
    $region41: #{mlp_forward.1} parent=1 // pred_fallthru
      _
    // Predicated region
    $region42: #{mlp_forward.1} parent=1 // pred_check
      _
    $region43: #{mlp_forward.1} parent=1 // pred_check_branch
      %2075 = sbr.rel (0) target = $region45
    $region44: #{mlp_forward.1} parent=1 // pred_region
      _
    $region45: #{mlp_forward.1} parent=1 // pred_fallthru
      _
    %2076 = vsyncpa [#allocation3], 1
    %2077 = vsyncpa [#allocation5], 1

</llo_original>
